<compile_context>
chip_gen: v7x
topology: tpu7x:2x2x1
jax: 0.10.0
libtpu: 0.0.40
codegen_flags: <defaults>
</compile_context>

<pallas_src>
import jax
import jax.numpy as jnp
from jax.experimental import pallas as pl
from jax.experimental.pallas import tpu as pltpu

NEG_BIG = -1e30  # Python float literal (NOT a jnp constant -> no capture)


# ----------------------------------------------------------------------------
# Single fused kernel: conv1+bn1 -> cat -> conv2+bn2 (+skip) -> conv3+bn3 (+skip)
#                      -> add/mean/max pool -> MLP -> log_softmax
# ----------------------------------------------------------------------------
def net_kernel(scal_ref,                 # SMEM [4]: c_edge1, c_edge2, c_edge3, prelu_a
               x0_ref,                   # [N, Cin]
               adjew_ref,                # [2, N, N]: adjacency (0/1), edge weights
               oh_ref,                   # [B, N] graph one-hot
               waug1_ref, waug2_ref, waug3_ref,   # [Fin, Fout+2] fused weight+attention
               vecs_ref,                 # [8, 108]: g1,be1,g2,be2,g3,be3,bm1,bm2 (lane-padded)
               wm1_ref, wm2_ref,         # MLP weights
               out_ref):                 # [B, 2]
    x0 = x0_ref[...].astype(jnp.float32)
    adj = adjew_ref[0]
    ew = adjew_ref[1]
    vecs = vecs_ref[...]

    # additive attention mask, built once, reused by all three layers
    mask_bias = jnp.where(adj > 0, 0.0, NEG_BIG)

    def gat_bn(x, waug_ref, gamma, beta, c_edge, fout):
        # one MXU matmul gives both the projected features and the two
        # attention logit columns: haug = x @ [W | W@att_src | W@att_dst]
        haug = jnp.dot(x, waug_ref[...], preferred_element_type=jnp.float32)  # [N, F+2]
        h = haug[:, :fout]                                                    # [N, F]
        a_src = haug[:, fout:fout + 1]                                        # [N, 1]
        a_dst = haug[:, fout + 1:fout + 2]                                    # [N, 1]
        # logits[i, j] for edge j -> i ; edge term = e_ij * <lin_edge_w, att_edge>
        logits = a_dst + jnp.transpose(a_src) + ew * c_edge                   # [N, N]
        logits = jnp.maximum(logits, 0.2 * logits)                            # leaky_relu(0.2)
        logits = logits + mask_bias
        m = jnp.max(logits, axis=-1, keepdims=True)
        p = jnp.exp(logits - m)                 # masked entries underflow to 0 (self-loop => finite m)
        denom = jnp.sum(p, axis=-1, keepdims=True)
        attn = p * pl.reciprocal(denom, approx=True)                          # EUP vrcp
        out = jnp.dot(attn, h, preferred_element_type=jnp.float32)            # [N, F]
        # (GAT bias omitted: cancels under training-mode BatchNorm)
        # BatchNorm1d over nodes, single-pass stats (eps=1e-5)
        n = out.shape[0]
        s1 = jnp.sum(out, axis=0, keepdims=True)
        s2 = jnp.sum(out * out, axis=0, keepdims=True)
        mu = s1 * (1.0 / n)
        var = jnp.maximum(s2 * (1.0 / n) - mu * mu, 0.0)
        xhat = (out - mu) * jax.lax.rsqrt(var + 1e-5)
        return gamma * xhat + beta

    x1 = gat_bn(x0, waug1_ref, vecs[0:1, :32], vecs[1:2, :32], scal_ref[0], 32)
    x1 = jnp.concatenate([x1, x0], axis=1)                                    # cat([x1, x0.x], dim=1)
    x2 = gat_bn(x1, waug2_ref, vecs[2:3, :36], vecs[3:4, :36], scal_ref[1], 36) + x1
    x3 = gat_bn(x2, waug3_ref, vecs[4:5, :36], vecs[5:6, :36], scal_ref[2], 36) + x2

    # --- global add / mean / max pooling -------------------------------------
    oh = oh_ref[...]                                                          # [B, N]
    x_add = jnp.dot(oh, x3, preferred_element_type=jnp.float32)               # [B, F]
    counts = jnp.maximum(jnp.sum(oh, axis=-1, keepdims=True), 1.0)            # guard (empty graph)
    x_mean = x_add / counts
    nb = oh.shape[0]
    max_rows = []
    for b in range(nb):                                                       # static B, 2-D masked max
        m_b = jnp.where(oh[b, :, None] > 0, x3, NEG_BIG)
        max_rows.append(jnp.max(m_b, axis=0, keepdims=True))
    x_max = jnp.concatenate(max_rows, axis=0)                                 # [B, F]
    feat = jnp.concatenate([x_add, x_max, x_mean], axis=1)                    # [B, 3F]

    # --- MLP: Linear -> Dropout(p=0) -> PReLU -> Linear, then log_softmax ----
    bm1 = vecs[6:7, :]                                                        # [1, 108]
    bm2 = vecs[7:8, :2]                                                       # [1, 2]
    h1 = jnp.dot(feat, wm1_ref[...], preferred_element_type=jnp.float32) + bm1
    a = scal_ref[3]
    h1 = jnp.where(h1 >= 0, h1, a * h1)                                       # PReLU
    logits = jnp.dot(h1, wm2_ref[...], preferred_element_type=jnp.float32) + bm2
    m = jnp.max(logits, axis=-1, keepdims=True)
    lse = m + jnp.log(jnp.sum(jnp.exp(logits - m), axis=-1, keepdims=True))
    out_ref[...] = logits - lse                                               # log_softmax


# ----------------------------------------------------------------------------
# Wrapper: one pallas_call, no grid (nothing to pipeline at this size)
# ----------------------------------------------------------------------------
@jax.jit
def net_forward(scalars, x0, adjew, onehot, waug1, waug2, waug3, vecs, wm1, wm2):
    B = onehot.shape[0]
    vmem = pl.BlockSpec(memory_space=pltpu.MemorySpace.VMEM)
    smem = pl.BlockSpec(memory_space=pltpu.MemorySpace.SMEM)
    return pl.pallas_call(
        net_kernel,
        out_shape=jax.ShapeDtypeStruct((B, 2), jnp.float32),
        in_specs=[smem] + [vmem] * 9,
        out_specs=vmem,
    )(scalars, x0, adjew, onehot, waug1, waug2, waug3, vecs, wm1, wm2)


# ----------------------------------------------------------------------------
# Parameter init (deterministic, shapes follow Net.__init__)
# ----------------------------------------------------------------------------
def _glorot(key, shape):
    lim = jnp.sqrt(6.0 / (shape[0] + shape[1]))
    return jax.random.uniform(key, shape, jnp.float32, -lim, lim)


def make_gat_params(key, fin, fout):
    ks = jax.random.split(key, 7)
    return dict(
        w=_glorot(ks[0], (fin, fout)),
        att_src=_glorot(ks[1], (1, fout)),
        att_dst=_glorot(ks[2], (1, fout)),
        att_edge=_glorot(ks[3], (1, fout)),
        lin_edge=_glorot(ks[4], (1, fout)),
        # NOTE: GAT bias omitted — it cancels under training-mode BatchNorm.
        gamma=jnp.ones((1, fout), jnp.float32) + 0.1 * jax.random.normal(ks[5], (1, fout)),
        beta=0.1 * jax.random.normal(ks[6], (1, fout)),
    )


def make_mlp_params(key, fcat):
    ks = jax.random.split(key, 4)
    f3 = 3 * fcat
    return dict(
        w1=_glorot(ks[0], (f3, f3)),
        b1=0.1 * jax.random.normal(ks[1], (1, f3)),
        a=jnp.float32(0.25),                             # PReLU default slope
        w2=_glorot(ks[2], (f3, 2)),
        b2=0.1 * jax.random.normal(ks[3], (1, 2)),
    )


def pack_gat(p):
    """Fold parameters once (outside the kernel): fused weight+attention matrix
    and the scalar edge-attention coefficient."""
    att_sd = jnp.stack([p["att_src"][0], p["att_dst"][0]], axis=1)   # [F, 2]
    w_aug = jnp.concatenate([p["w"], p["w"] @ att_sd], axis=1)       # [Fin, F+2]
    c_edge = jnp.sum(p["lin_edge"] * p["att_edge"])                  # scalar
    return w_aug, p["gamma"], p["beta"], c_edge


def _pad_row(v, width):
    v = v.reshape(-1)
    return jnp.zeros((width,), jnp.float32).at[: v.shape[0]].set(v)


# ----------------------------------------------------------------------------
if __name__ == "__main__":
    key = jax.random.PRNGKey(0)
    k_x, k_ew, k1, k2, k3, kmlp = jax.random.split(key, 6)

    in_channels, hidden_channels = 4, 32
    fcat = hidden_channels + in_channels                 # 36
    f3 = 3 * fcat                                        # 108
    N, B = 12, 2                                         # 2 graphs of 6 nodes

    # node features
    x = jax.random.normal(k_x, (N, in_channels), jnp.float32)

    # ring edges (both directions) inside each graph, no self loops in the input
    src, dst = [], []
    for g in range(B):
        o = g * 6
        for i in range(6):
            j = (i + 1) % 6
            src += [o + i, o + j]
            dst += [o + j, o + i]
    edge_index = jnp.array([src, dst], dtype=jnp.int32)  # [2, 24]
    E = edge_index.shape[1]
    edge_weight = jax.random.uniform(k_ew, (E,), jnp.float32)
    batch = jnp.array([0] * 6 + [1] * 6, dtype=jnp.int32)

    # dense adjacency / edge-weight matrices (adj[dst, src]);
    # self-loops with per-destination mean fill (PyG fill_value='mean')
    adj = jnp.zeros((N, N), jnp.float32).at[edge_index[1], edge_index[0]].set(1.0)
    ew = jnp.zeros((N, N), jnp.float32).at[edge_index[1], edge_index[0]].set(edge_weight)
    diag = jnp.arange(N)
    deg = jnp.zeros((N,), jnp.float32).at[edge_index[1]].add(1.0)
    wsum = jnp.zeros((N,), jnp.float32).at[edge_index[1]].add(edge_weight)
    fill = jnp.where(deg > 0, wsum / jnp.maximum(deg, 1.0), 0.0)
    adj = adj.at[diag, diag].set(1.0)
    ew = ew.at[diag, diag].set(fill)
    adjew = jnp.stack([adj, ew], axis=0)                                      # [2, N, N]

    onehot = (batch[None, :] == jnp.arange(B)[:, None]).astype(jnp.float32)   # [B, N]

    p1 = make_gat_params(k1, in_channels, hidden_channels)
    p2 = make_gat_params(k2, fcat, fcat)
    p3 = make_gat_params(k3, fcat, fcat)
    pmlp = make_mlp_params(kmlp, fcat)

    waug1, g1, be1, c1 = pack_gat(p1)
    waug2, g2, be2, c2 = pack_gat(p2)
    waug3, g3, be3, c3 = pack_gat(p3)

    # SMEM scalars: per-layer edge-attention coefficient + PReLU slope
    scalars = jnp.array([c1, c2, c3, pmlp["a"]], dtype=jnp.float32)
    # single packed slab for all small vector params
    vecs = jnp.stack([
        _pad_row(g1, f3), _pad_row(be1, f3),
        _pad_row(g2, f3), _pad_row(be2, f3),
        _pad_row(g3, f3), _pad_row(be3, f3),
        _pad_row(pmlp["b1"], f3), _pad_row(pmlp["b2"], f3),
    ], axis=0)                                                                # [8, 108]

    out = net_forward(scalars, x, adjew, onehot,
                      waug1, waug2, waug3, vecs, pmlp["w1"], pmlp["w2"])
    out = jax.block_until_ready(out)

    assert out.shape == (B, 2)
    assert bool(jnp.all(jnp.isfinite(out)))
    # rows of exp(log_softmax) must sum to 1
    assert bool(jnp.allclose(jnp.exp(out).sum(-1), 1.0, atol=1e-4))
    print("KERNEL_OK")
</pallas_src>

<mosaic_0001>
module attributes {stable_mosaic.version = 11 : i64} {
  func.func @net_kernel(%arg0: memref<4xf32, #tpu.memory_space<smem>>, %arg1: memref<12x4xf32, #tpu.memory_space<vmem>>, %arg2: memref<2x12x12xf32, #tpu.memory_space<vmem>>, %arg3: memref<2x12xf32, #tpu.memory_space<vmem>>, %arg4: memref<4x34xf32, #tpu.memory_space<vmem>>, %arg5: memref<36x38xf32, #tpu.memory_space<vmem>>, %arg6: memref<36x38xf32, #tpu.memory_space<vmem>>, %arg7: memref<8x108xf32, #tpu.memory_space<vmem>>, %arg8: memref<108x108xf32, #tpu.memory_space<vmem>>, %arg9: memref<108x2xf32, #tpu.memory_space<vmem>>, %arg10: memref<2x2xf32, #tpu.memory_space<vmem>>) attributes {dimension_semantics = [], scalar_prefetch = 0 : i64, scratch_operands = 0 : i64, tpu.core_type = #tpu.core_type<tc>} {
    %c0 = arith.constant 0 : index
    %c0_0 = arith.constant 0 : index
    %0 = vector.load %arg1[%c0, %c0_0] : memref<12x4xf32, #tpu.memory_space<vmem>>, vector<12x4xf32>
    %c0_1 = arith.constant 0 : index
    %c0_2 = arith.constant 0 : index
    %c0_3 = arith.constant 0 : index
    %1 = vector.load %arg2[%c0_1, %c0_2, %c0_3] : memref<2x12x12xf32, #tpu.memory_space<vmem>>, vector<1x12x12xf32>
    %2 = vector.shape_cast %1 : vector<1x12x12xf32> to vector<12x12xf32>
    %c1 = arith.constant 1 : index
    %c0_4 = arith.constant 0 : index
    %c0_5 = arith.constant 0 : index
    %3 = vector.load %arg2[%c1, %c0_4, %c0_5] : memref<2x12x12xf32, #tpu.memory_space<vmem>>, vector<1x12x12xf32>
    %4 = vector.shape_cast %3 : vector<1x12x12xf32> to vector<12x12xf32>
    %c0_6 = arith.constant 0 : index
    %c0_7 = arith.constant 0 : index
    %5 = vector.load %arg7[%c0_6, %c0_7] : memref<8x108xf32, #tpu.memory_space<vmem>>, vector<8x108xf32>
    %cst = arith.constant 0.000000e+00 : f32
    %6 = vector.broadcast %cst : f32 to vector<12x12xf32>
    %7 = arith.cmpf ogt, %2, %6 : vector<12x12xf32>
    %cst_8 = arith.constant 0.000000e+00 : f32
    %cst_9 = arith.constant -1.000000e+30 : f32
    %8 = vector.broadcast %cst_8 : f32 to vector<12x12xf32>
    %9 = vector.broadcast %cst_9 : f32 to vector<12x12xf32>
    %10 = arith.select %7, %8, %9 : vector<12x12xi1>, vector<12x12xf32>
    %11 = vector.extract_strided_slice %5 {offsets = [0, 0], sizes = [1, 32], strides = [1, 1]} : vector<8x108xf32> to vector<1x32xf32>
    %12 = vector.extract_strided_slice %5 {offsets = [1, 0], sizes = [1, 32], strides = [1, 1]} : vector<8x108xf32> to vector<1x32xf32>
    %c0_10 = arith.constant 0 : index
    %13 = memref.load %arg0[%c0_10] : memref<4xf32, #tpu.memory_space<smem>>
    %c0_11 = arith.constant 0 : index
    %c0_12 = arith.constant 0 : index
    %14 = vector.load %arg4[%c0_11, %c0_12] : memref<4x34xf32, #tpu.memory_space<vmem>>, vector<4x34xf32>
    %cst_13 = arith.constant dense<0.000000e+00> : vector<12x34xf32>
    %15 = tpu.matmul %0, %14, %cst_13 {dimension_numbers = #tpu.dot_dimension_numbers<[1], [0], [0], [1], [0, 0, 1, 1], [], []>} : vector<12x4xf32>, vector<4x34xf32>, vector<12x34xf32> -> vector<12x34xf32>
    %16 = vector.extract_strided_slice %15 {offsets = [0, 0], sizes = [12, 32], strides = [1, 1]} : vector<12x34xf32> to vector<12x32xf32>
    %17 = vector.extract_strided_slice %15 {offsets = [0, 32], sizes = [12, 1], strides = [1, 1]} : vector<12x34xf32> to vector<12x1xf32>
    %18 = vector.extract_strided_slice %15 {offsets = [0, 33], sizes = [12, 1], strides = [1, 1]} : vector<12x34xf32> to vector<12x1xf32>
    %19 = tpu.transpose %17, [1, 0] : vector<12x1xf32> -> vector<1x12xf32>
    %20 = vector.broadcast %18 : vector<12x1xf32> to vector<12x12xf32>
    %21 = vector.broadcast %19 : vector<1x12xf32> to vector<12x12xf32>
    %22 = arith.addf %20, %21 : vector<12x12xf32>
    %23 = vector.broadcast %13 : f32 to vector<12x12xf32>
    %24 = arith.mulf %4, %23 : vector<12x12xf32>
    %25 = arith.addf %22, %24 : vector<12x12xf32>
    %cst_14 = arith.constant 2.000000e-01 : f32
    %26 = vector.broadcast %cst_14 : f32 to vector<12x12xf32>
    %27 = arith.mulf %26, %25 : vector<12x12xf32>
    %28 = arith.maximumf %25, %27 : vector<12x12xf32>
    %29 = arith.addf %28, %10 : vector<12x12xf32>
    %cst_15 = arith.constant dense<0xFF800000> : vector<12xf32>
    %30 = vector.multi_reduction <maximumf>, %29, %cst_15 [1] : vector<12x12xf32> to vector<12xf32>
    %31 = vector.shape_cast %30 : vector<12xf32> to vector<12x1xf32>
    %32 = vector.broadcast %31 : vector<12x1xf32> to vector<12x12xf32>
    %33 = arith.subf %29, %32 : vector<12x12xf32>
    %34 = math.exp %33 : vector<12x12xf32>
    %cst_16 = arith.constant dense<0.000000e+00> : vector<12xf32>
    %35 = vector.multi_reduction <add>, %34, %cst_16 [1] : vector<12x12xf32> to vector<12xf32>
    %36 = vector.shape_cast %35 : vector<12xf32> to vector<12x1xf32>
    %37 = tpu.reciprocal %36 {approx = true} : vector<12x1xf32> -> vector<12x1xf32>
    %38 = vector.broadcast %37 : vector<12x1xf32> to vector<12x12xf32>
    %39 = arith.mulf %34, %38 : vector<12x12xf32>
    %cst_17 = arith.constant dense<0.000000e+00> : vector<12x32xf32>
    %40 = tpu.matmul %39, %16, %cst_17 {dimension_numbers = #tpu.dot_dimension_numbers<[1], [0], [0], [1], [0, 0, 1, 1], [], []>} : vector<12x12xf32>, vector<12x32xf32>, vector<12x32xf32> -> vector<12x32xf32>
    %cst_18 = arith.constant dense<0.000000e+00> : vector<32xf32>
    %41 = vector.multi_reduction <add>, %40, %cst_18 [0] : vector<12x32xf32> to vector<32xf32>
    %42 = vector.shape_cast %41 : vector<32xf32> to vector<1x32xf32>
    %43 = arith.mulf %40, %40 : vector<12x32xf32>
    %cst_19 = arith.constant dense<0.000000e+00> : vector<32xf32>
    %44 = vector.multi_reduction <add>, %43, %cst_19 [0] : vector<12x32xf32> to vector<32xf32>
    %45 = vector.shape_cast %44 : vector<32xf32> to vector<1x32xf32>
    %cst_20 = arith.constant 0.0833333358 : f32
    %46 = vector.broadcast %cst_20 : f32 to vector<1x32xf32>
    %47 = arith.mulf %42, %46 : vector<1x32xf32>
    %cst_21 = arith.constant 0.0833333358 : f32
    %48 = vector.broadcast %cst_21 : f32 to vector<1x32xf32>
    %49 = arith.mulf %45, %48 : vector<1x32xf32>
    %50 = arith.mulf %47, %47 : vector<1x32xf32>
    %51 = arith.subf %49, %50 : vector<1x32xf32>
    %cst_22 = arith.constant 0.000000e+00 : f32
    %52 = vector.broadcast %cst_22 : f32 to vector<1x32xf32>
    %53 = arith.maximumf %51, %52 : vector<1x32xf32>
    %54 = vector.broadcast %47 : vector<1x32xf32> to vector<12x32xf32>
    %55 = arith.subf %40, %54 : vector<12x32xf32>
    %cst_23 = arith.constant 9.99999974E-6 : f32
    %56 = vector.broadcast %cst_23 : f32 to vector<1x32xf32>
    %57 = arith.addf %53, %56 : vector<1x32xf32>
    %58 = math.rsqrt %57 : vector<1x32xf32>
    %59 = vector.broadcast %58 : vector<1x32xf32> to vector<12x32xf32>
    %60 = arith.mulf %55, %59 : vector<12x32xf32>
    %61 = vector.broadcast %11 : vector<1x32xf32> to vector<12x32xf32>
    %62 = arith.mulf %61, %60 : vector<12x32xf32>
    %63 = vector.broadcast %12 : vector<1x32xf32> to vector<12x32xf32>
    %64 = arith.addf %62, %63 : vector<12x32xf32>
    %65 = tpu.concatenate %64, %0 in 1 : vector<12x32xf32>, vector<12x4xf32> -> vector<12x36xf32>
    %66 = vector.extract_strided_slice %5 {offsets = [2, 0], sizes = [1, 36], strides = [1, 1]} : vector<8x108xf32> to vector<1x36xf32>
    %67 = vector.extract_strided_slice %5 {offsets = [3, 0], sizes = [1, 36], strides = [1, 1]} : vector<8x108xf32> to vector<1x36xf32>
    %c1_24 = arith.constant 1 : index
    %68 = memref.load %arg0[%c1_24] : memref<4xf32, #tpu.memory_space<smem>>
    %c0_25 = arith.constant 0 : index
    %c0_26 = arith.constant 0 : index
    %69 = vector.load %arg5[%c0_25, %c0_26] : memref<36x38xf32, #tpu.memory_space<vmem>>, vector<36x38xf32>
    %cst_27 = arith.constant dense<0.000000e+00> : vector<12x38xf32>
    %70 = tpu.matmul %65, %69, %cst_27 {dimension_numbers = #tpu.dot_dimension_numbers<[1], [0], [0], [1], [0, 0, 1, 1], [], []>} : vector<12x36xf32>, vector<36x38xf32>, vector<12x38xf32> -> vector<12x38xf32>
    %71 = vector.extract_strided_slice %70 {offsets = [0, 0], sizes = [12, 36], strides = [1, 1]} : vector<12x38xf32> to vector<12x36xf32>
    %72 = vector.extract_strided_slice %70 {offsets = [0, 36], sizes = [12, 1], strides = [1, 1]} : vector<12x38xf32> to vector<12x1xf32>
    %73 = vector.extract_strided_slice %70 {offsets = [0, 37], sizes = [12, 1], strides = [1, 1]} : vector<12x38xf32> to vector<12x1xf32>
    %74 = tpu.transpose %72, [1, 0] : vector<12x1xf32> -> vector<1x12xf32>
    %75 = vector.broadcast %73 : vector<12x1xf32> to vector<12x12xf32>
    %76 = vector.broadcast %74 : vector<1x12xf32> to vector<12x12xf32>
    %77 = arith.addf %75, %76 : vector<12x12xf32>
    %78 = vector.broadcast %68 : f32 to vector<12x12xf32>
    %79 = arith.mulf %4, %78 : vector<12x12xf32>
    %80 = arith.addf %77, %79 : vector<12x12xf32>
    %cst_28 = arith.constant 2.000000e-01 : f32
    %81 = vector.broadcast %cst_28 : f32 to vector<12x12xf32>
    %82 = arith.mulf %81, %80 : vector<12x12xf32>
    %83 = arith.maximumf %80, %82 : vector<12x12xf32>
    %84 = arith.addf %83, %10 : vector<12x12xf32>
    %cst_29 = arith.constant dense<0xFF800000> : vector<12xf32>
    %85 = vector.multi_reduction <maximumf>, %84, %cst_29 [1] : vector<12x12xf32> to vector<12xf32>
    %86 = vector.shape_cast %85 : vector<12xf32> to vector<12x1xf32>
    %87 = vector.broadcast %86 : vector<12x1xf32> to vector<12x12xf32>
    %88 = arith.subf %84, %87 : vector<12x12xf32>
    %89 = math.exp %88 : vector<12x12xf32>
    %cst_30 = arith.constant dense<0.000000e+00> : vector<12xf32>
    %90 = vector.multi_reduction <add>, %89, %cst_30 [1] : vector<12x12xf32> to vector<12xf32>
    %91 = vector.shape_cast %90 : vector<12xf32> to vector<12x1xf32>
    %92 = tpu.reciprocal %91 {approx = true} : vector<12x1xf32> -> vector<12x1xf32>
    %93 = vector.broadcast %92 : vector<12x1xf32> to vector<12x12xf32>
    %94 = arith.mulf %89, %93 : vector<12x12xf32>
    %cst_31 = arith.constant dense<0.000000e+00> : vector<12x36xf32>
    %95 = tpu.matmul %94, %71, %cst_31 {dimension_numbers = #tpu.dot_dimension_numbers<[1], [0], [0], [1], [0, 0, 1, 1], [], []>} : vector<12x12xf32>, vector<12x36xf32>, vector<12x36xf32> -> vector<12x36xf32>
    %cst_32 = arith.constant dense<0.000000e+00> : vector<36xf32>
    %96 = vector.multi_reduction <add>, %95, %cst_32 [0] : vector<12x36xf32> to vector<36xf32>
    %97 = vector.shape_cast %96 : vector<36xf32> to vector<1x36xf32>
    %98 = arith.mulf %95, %95 : vector<12x36xf32>
    %cst_33 = arith.constant dense<0.000000e+00> : vector<36xf32>
    %99 = vector.multi_reduction <add>, %98, %cst_33 [0] : vector<12x36xf32> to vector<36xf32>
    %100 = vector.shape_cast %99 : vector<36xf32> to vector<1x36xf32>
    %cst_34 = arith.constant 0.0833333358 : f32
    %101 = vector.broadcast %cst_34 : f32 to vector<1x36xf32>
    %102 = arith.mulf %97, %101 : vector<1x36xf32>
    %cst_35 = arith.constant 0.0833333358 : f32
    %103 = vector.broadcast %cst_35 : f32 to vector<1x36xf32>
    %104 = arith.mulf %100, %103 : vector<1x36xf32>
    %105 = arith.mulf %102, %102 : vector<1x36xf32>
    %106 = arith.subf %104, %105 : vector<1x36xf32>
    %cst_36 = arith.constant 0.000000e+00 : f32
    %107 = vector.broadcast %cst_36 : f32 to vector<1x36xf32>
    %108 = arith.maximumf %106, %107 : vector<1x36xf32>
    %109 = vector.broadcast %102 : vector<1x36xf32> to vector<12x36xf32>
    %110 = arith.subf %95, %109 : vector<12x36xf32>
    %cst_37 = arith.constant 9.99999974E-6 : f32
    %111 = vector.broadcast %cst_37 : f32 to vector<1x36xf32>
    %112 = arith.addf %108, %111 : vector<1x36xf32>
    %113 = math.rsqrt %112 : vector<1x36xf32>
    %114 = vector.broadcast %113 : vector<1x36xf32> to vector<12x36xf32>
    %115 = arith.mulf %110, %114 : vector<12x36xf32>
    %116 = vector.broadcast %66 : vector<1x36xf32> to vector<12x36xf32>
    %117 = arith.mulf %116, %115 : vector<12x36xf32>
    %118 = vector.broadcast %67 : vector<1x36xf32> to vector<12x36xf32>
    %119 = arith.addf %117, %118 : vector<12x36xf32>
    %120 = arith.addf %119, %65 : vector<12x36xf32>
    %121 = vector.extract_strided_slice %5 {offsets = [4, 0], sizes = [1, 36], strides = [1, 1]} : vector<8x108xf32> to vector<1x36xf32>
    %122 = vector.extract_strided_slice %5 {offsets = [5, 0], sizes = [1, 36], strides = [1, 1]} : vector<8x108xf32> to vector<1x36xf32>
    %c2 = arith.constant 2 : index
    %123 = memref.load %arg0[%c2] : memref<4xf32, #tpu.memory_space<smem>>
    %c0_38 = arith.constant 0 : index
    %c0_39 = arith.constant 0 : index
    %124 = vector.load %arg6[%c0_38, %c0_39] : memref<36x38xf32, #tpu.memory_space<vmem>>, vector<36x38xf32>
    %cst_40 = arith.constant dense<0.000000e+00> : vector<12x38xf32>
    %125 = tpu.matmul %120, %124, %cst_40 {dimension_numbers = #tpu.dot_dimension_numbers<[1], [0], [0], [1], [0, 0, 1, 1], [], []>} : vector<12x36xf32>, vector<36x38xf32>, vector<12x38xf32> -> vector<12x38xf32>
    %126 = vector.extract_strided_slice %125 {offsets = [0, 0], sizes = [12, 36], strides = [1, 1]} : vector<12x38xf32> to vector<12x36xf32>
    %127 = vector.extract_strided_slice %125 {offsets = [0, 36], sizes = [12, 1], strides = [1, 1]} : vector<12x38xf32> to vector<12x1xf32>
    %128 = vector.extract_strided_slice %125 {offsets = [0, 37], sizes = [12, 1], strides = [1, 1]} : vector<12x38xf32> to vector<12x1xf32>
    %129 = tpu.transpose %127, [1, 0] : vector<12x1xf32> -> vector<1x12xf32>
    %130 = vector.broadcast %128 : vector<12x1xf32> to vector<12x12xf32>
    %131 = vector.broadcast %129 : vector<1x12xf32> to vector<12x12xf32>
    %132 = arith.addf %130, %131 : vector<12x12xf32>
    %133 = vector.broadcast %123 : f32 to vector<12x12xf32>
    %134 = arith.mulf %4, %133 : vector<12x12xf32>
    %135 = arith.addf %132, %134 : vector<12x12xf32>
    %cst_41 = arith.constant 2.000000e-01 : f32
    %136 = vector.broadcast %cst_41 : f32 to vector<12x12xf32>
    %137 = arith.mulf %136, %135 : vector<12x12xf32>
    %138 = arith.maximumf %135, %137 : vector<12x12xf32>
    %139 = arith.addf %138, %10 : vector<12x12xf32>
    %cst_42 = arith.constant dense<0xFF800000> : vector<12xf32>
    %140 = vector.multi_reduction <maximumf>, %139, %cst_42 [1] : vector<12x12xf32> to vector<12xf32>
    %141 = vector.shape_cast %140 : vector<12xf32> to vector<12x1xf32>
    %142 = vector.broadcast %141 : vector<12x1xf32> to vector<12x12xf32>
    %143 = arith.subf %139, %142 : vector<12x12xf32>
    %144 = math.exp %143 : vector<12x12xf32>
    %cst_43 = arith.constant dense<0.000000e+00> : vector<12xf32>
    %145 = vector.multi_reduction <add>, %144, %cst_43 [1] : vector<12x12xf32> to vector<12xf32>
    %146 = vector.shape_cast %145 : vector<12xf32> to vector<12x1xf32>
    %147 = tpu.reciprocal %146 {approx = true} : vector<12x1xf32> -> vector<12x1xf32>
    %148 = vector.broadcast %147 : vector<12x1xf32> to vector<12x12xf32>
    %149 = arith.mulf %144, %148 : vector<12x12xf32>
    %cst_44 = arith.constant dense<0.000000e+00> : vector<12x36xf32>
    %150 = tpu.matmul %149, %126, %cst_44 {dimension_numbers = #tpu.dot_dimension_numbers<[1], [0], [0], [1], [0, 0, 1, 1], [], []>} : vector<12x12xf32>, vector<12x36xf32>, vector<12x36xf32> -> vector<12x36xf32>
    %cst_45 = arith.constant dense<0.000000e+00> : vector<36xf32>
    %151 = vector.multi_reduction <add>, %150, %cst_45 [0] : vector<12x36xf32> to vector<36xf32>
    %152 = vector.shape_cast %151 : vector<36xf32> to vector<1x36xf32>
    %153 = arith.mulf %150, %150 : vector<12x36xf32>
    %cst_46 = arith.constant dense<0.000000e+00> : vector<36xf32>
    %154 = vector.multi_reduction <add>, %153, %cst_46 [0] : vector<12x36xf32> to vector<36xf32>
    %155 = vector.shape_cast %154 : vector<36xf32> to vector<1x36xf32>
    %cst_47 = arith.constant 0.0833333358 : f32
    %156 = vector.broadcast %cst_47 : f32 to vector<1x36xf32>
    %157 = arith.mulf %152, %156 : vector<1x36xf32>
    %cst_48 = arith.constant 0.0833333358 : f32
    %158 = vector.broadcast %cst_48 : f32 to vector<1x36xf32>
    %159 = arith.mulf %155, %158 : vector<1x36xf32>
    %160 = arith.mulf %157, %157 : vector<1x36xf32>
    %161 = arith.subf %159, %160 : vector<1x36xf32>
    %cst_49 = arith.constant 0.000000e+00 : f32
    %162 = vector.broadcast %cst_49 : f32 to vector<1x36xf32>
    %163 = arith.maximumf %161, %162 : vector<1x36xf32>
    %164 = vector.broadcast %157 : vector<1x36xf32> to vector<12x36xf32>
    %165 = arith.subf %150, %164 : vector<12x36xf32>
    %cst_50 = arith.constant 9.99999974E-6 : f32
    %166 = vector.broadcast %cst_50 : f32 to vector<1x36xf32>
    %167 = arith.addf %163, %166 : vector<1x36xf32>
    %168 = math.rsqrt %167 : vector<1x36xf32>
    %169 = vector.broadcast %168 : vector<1x36xf32> to vector<12x36xf32>
    %170 = arith.mulf %165, %169 : vector<12x36xf32>
    %171 = vector.broadcast %121 : vector<1x36xf32> to vector<12x36xf32>
    %172 = arith.mulf %171, %170 : vector<12x36xf32>
    %173 = vector.broadcast %122 : vector<1x36xf32> to vector<12x36xf32>
    %174 = arith.addf %172, %173 : vector<12x36xf32>
    %175 = arith.addf %174, %120 : vector<12x36xf32>
    %c0_51 = arith.constant 0 : index
    %c0_52 = arith.constant 0 : index
    %176 = vector.load %arg3[%c0_51, %c0_52] : memref<2x12xf32, #tpu.memory_space<vmem>>, vector<2x12xf32>
    %cst_53 = arith.constant dense<0.000000e+00> : vector<2x36xf32>
    %177 = tpu.matmul %176, %175, %cst_53 {dimension_numbers = #tpu.dot_dimension_numbers<[1], [0], [0], [1], [0, 0, 1, 1], [], []>} : vector<2x12xf32>, vector<12x36xf32>, vector<2x36xf32> -> vector<2x36xf32>
    %cst_54 = arith.constant dense<0.000000e+00> : vector<2xf32>
    %178 = vector.multi_reduction <add>, %176, %cst_54 [1] : vector<2x12xf32> to vector<2xf32>
    %179 = vector.shape_cast %178 : vector<2xf32> to vector<2x1xf32>
    %cst_55 = arith.constant 1.000000e+00 : f32
    %180 = vector.broadcast %cst_55 : f32 to vector<2x1xf32>
    %181 = arith.maximumf %179, %180 : vector<2x1xf32>
    %182 = vector.broadcast %181 : vector<2x1xf32> to vector<2x36xf32>
    %183 = arith.divf %177, %182 : vector<2x36xf32>
    %184 = vector.extract_strided_slice %176 {offsets = [0, 0], sizes = [1, 12], strides = [1, 1]} : vector<2x12xf32> to vector<1x12xf32>
    %185 = vector.shape_cast %184 : vector<1x12xf32> to vector<12xf32>
    %186 = vector.shape_cast %185 : vector<12xf32> to vector<12x1xf32>
    %cst_56 = arith.constant 0.000000e+00 : f32
    %187 = vector.broadcast %cst_56 : f32 to vector<12x1xf32>
    %188 = arith.cmpf ogt, %186, %187 : vector<12x1xf32>
    %cst_57 = arith.constant -1.000000e+30 : f32
    %189 = vector.shape_cast %188 : vector<12x1xi1> to vector<12x1xi1>
    %190 = vector.broadcast %189 : vector<12x1xi1> to vector<12x36xi1>
    %191 = vector.broadcast %cst_57 : f32 to vector<12x36xf32>
    %192 = arith.select %190, %175, %191 : vector<12x36xi1>, vector<12x36xf32>
    %cst_58 = arith.constant dense<0xFF800000> : vector<36xf32>
    %193 = vector.multi_reduction <maximumf>, %192, %cst_58 [0] : vector<12x36xf32> to vector<36xf32>
    %194 = vector.shape_cast %193 : vector<36xf32> to vector<1x36xf32>
    %195 = vector.extract_strided_slice %176 {offsets = [1, 0], sizes = [1, 12], strides = [1, 1]} : vector<2x12xf32> to vector<1x12xf32>
    %196 = vector.shape_cast %195 : vector<1x12xf32> to vector<12xf32>
    %197 = vector.shape_cast %196 : vector<12xf32> to vector<12x1xf32>
    %cst_59 = arith.constant 0.000000e+00 : f32
    %198 = vector.broadcast %cst_59 : f32 to vector<12x1xf32>
    %199 = arith.cmpf ogt, %197, %198 : vector<12x1xf32>
    %cst_60 = arith.constant -1.000000e+30 : f32
    %200 = vector.shape_cast %199 : vector<12x1xi1> to vector<12x1xi1>
    %201 = vector.broadcast %200 : vector<12x1xi1> to vector<12x36xi1>
    %202 = vector.broadcast %cst_60 : f32 to vector<12x36xf32>
    %203 = arith.select %201, %175, %202 : vector<12x36xi1>, vector<12x36xf32>
    %cst_61 = arith.constant dense<0xFF800000> : vector<36xf32>
    %204 = vector.multi_reduction <maximumf>, %203, %cst_61 [0] : vector<12x36xf32> to vector<36xf32>
    %205 = vector.shape_cast %204 : vector<36xf32> to vector<1x36xf32>
    %206 = tpu.concatenate %194, %205 in 0 : vector<1x36xf32>, vector<1x36xf32> -> vector<2x36xf32>
    %207 = tpu.concatenate %177, %206, %183 in 1 : vector<2x36xf32>, vector<2x36xf32>, vector<2x36xf32> -> vector<2x108xf32>
    %208 = vector.extract_strided_slice %5 {offsets = [6, 0], sizes = [1, 108], strides = [1, 1]} : vector<8x108xf32> to vector<1x108xf32>
    %209 = vector.extract_strided_slice %5 {offsets = [7, 0], sizes = [1, 2], strides = [1, 1]} : vector<8x108xf32> to vector<1x2xf32>
    %c0_62 = arith.constant 0 : index
    %c0_63 = arith.constant 0 : index
    %210 = vector.load %arg8[%c0_62, %c0_63] : memref<108x108xf32, #tpu.memory_space<vmem>>, vector<108x108xf32>
    %cst_64 = arith.constant dense<0.000000e+00> : vector<2x108xf32>
    %211 = tpu.matmul %207, %210, %cst_64 {dimension_numbers = #tpu.dot_dimension_numbers<[1], [0], [0], [1], [0, 0, 1, 1], [], []>} : vector<2x108xf32>, vector<108x108xf32>, vector<2x108xf32> -> vector<2x108xf32>
    %212 = vector.broadcast %208 : vector<1x108xf32> to vector<2x108xf32>
    %213 = arith.addf %211, %212 : vector<2x108xf32>
    %c3 = arith.constant 3 : index
    %214 = memref.load %arg0[%c3] : memref<4xf32, #tpu.memory_space<smem>>
    %cst_65 = arith.constant 0.000000e+00 : f32
    %215 = vector.broadcast %cst_65 : f32 to vector<2x108xf32>
    %216 = arith.cmpf oge, %213, %215 : vector<2x108xf32>
    %217 = vector.broadcast %214 : f32 to vector<2x108xf32>
    %218 = arith.mulf %217, %213 : vector<2x108xf32>
    %219 = arith.select %216, %213, %218 : vector<2x108xi1>, vector<2x108xf32>
    %c0_66 = arith.constant 0 : index
    %c0_67 = arith.constant 0 : index
    %220 = vector.load %arg9[%c0_66, %c0_67] : memref<108x2xf32, #tpu.memory_space<vmem>>, vector<108x2xf32>
    %cst_68 = arith.constant dense<0.000000e+00> : vector<2x2xf32>
    %221 = tpu.matmul %219, %220, %cst_68 {dimension_numbers = #tpu.dot_dimension_numbers<[1], [0], [0], [1], [0, 0, 1, 1], [], []>} : vector<2x108xf32>, vector<108x2xf32>, vector<2x2xf32> -> vector<2x2xf32>
    %222 = vector.broadcast %209 : vector<1x2xf32> to vector<2x2xf32>
    %223 = arith.addf %221, %222 : vector<2x2xf32>
    %cst_69 = arith.constant dense<0xFF800000> : vector<2xf32>
    %224 = vector.multi_reduction <maximumf>, %223, %cst_69 [1] : vector<2x2xf32> to vector<2xf32>
    %225 = vector.shape_cast %224 : vector<2xf32> to vector<2x1xf32>
    %226 = vector.broadcast %225 : vector<2x1xf32> to vector<2x2xf32>
    %227 = arith.subf %223, %226 : vector<2x2xf32>
    %228 = math.exp %227 : vector<2x2xf32>
    %cst_70 = arith.constant dense<0.000000e+00> : vector<2xf32>
    %229 = vector.multi_reduction <add>, %228, %cst_70 [1] : vector<2x2xf32> to vector<2xf32>
    %230 = vector.shape_cast %229 : vector<2xf32> to vector<2x1xf32>
    %231 = math.log %230 : vector<2x1xf32>
    %232 = arith.addf %225, %231 : vector<2x1xf32>
    %233 = vector.broadcast %232 : vector<2x1xf32> to vector<2x2xf32>
    %234 = arith.subf %223, %233 : vector<2x2xf32>
    %c0_71 = arith.constant 0 : index
    %c0_72 = arith.constant 0 : index
    %235 = vector.load %arg10[%c0_71, %c0_72] : memref<2x2xf32, #tpu.memory_space<vmem>>, vector<2x2xf32>
    tpu.vector_store %arg10[%c0_71, %c0_72], %234 {strides = array<i32>} : memref<2x2xf32, #tpu.memory_space<vmem>>, vector<2x2xf32>,
    return
  }
}

</mosaic_0001>

<llo_original>
// kernel: net_forward.1
$region0: #{net_forward.1}
  #allocation0 [shape = 'u32[]', space=smem, size = 0x4, offset = 0x4, fixed_abs, tag = 'smem constant byte address 0x4 - core index']
  #allocation1 [shape = 'u32[144,128]{1,0:T(1,128)}', space=vmem, size = 0x12000, scoped, tag = 'internal scratch']
  %s0 = inlined_call_operand.vmem [shape: f32[4], index: 0, kind: input, shape index: {}]
  %s1 = inlined_call_operand.vmem [shape: f32[12,4], index: 1, kind: input, shape index: {}]
  %s2 = inlined_call_operand.vmem [shape: f32[2,12,12], index: 2, kind: input, shape index: {}]
  %s3 = inlined_call_operand.vmem [shape: f32[2,12], index: 3, kind: input, shape index: {}]
  %s4 = inlined_call_operand.vmem [shape: f32[4,34], index: 4, kind: input, shape index: {}]
  %s5 = inlined_call_operand.vmem [shape: f32[36,38], index: 5, kind: input, shape index: {}]
  %s6 = inlined_call_operand.vmem [shape: f32[36,38], index: 6, kind: input, shape index: {}]
  %s7 = inlined_call_operand.vmem [shape: f32[8,108], index: 7, kind: input, shape index: {}]
  %s8 = inlined_call_operand.vmem [shape: f32[108,108], index: 8, kind: input, shape index: {}]
  %s9 = inlined_call_operand.vmem [shape: f32[108,2], index: 9, kind: input, shape index: {}]
  %s10 = inlined_call_operand.hbm [shape: f32[2,2], index: 10, kind: output, shape index: {}]
  %s11 = sld [smem:[#allocation0]]
  $region54: #{net_forward.1} parent=0
    _
  %s13 = ssub.s32 1, %s11
  %s14 = scalar_select 0, %s13, %s11
  $region1: #{net_forward.1} parent=0
    #allocation2 [shape = 'u8[512]{0}', space=smem, size = 0x200, scoped, tag = 'input window, operand 0, single buffered']
    #allocation3 [shape = 's32[1]{0}', space=sflag, size = 0x4, scoped, tag = 'scoped memory for net_forward.1']
    #allocation4 [shape = 's32[1]{0}', space=sflag, size = 0x4, scoped, tag = 'scoped memory for net_forward.1']
    #allocation5 [shape = 'u8[1024]{0}', space=vmem, size = 0x400, scoped, tag = 'output window, operand 0, single buffered']
    %15 = vsyncpa [#allocation4], 0
    %16 = vsyncpa [#allocation3], 0
    // Predicated region
    $region2: #{net_forward.1} parent=1 // pred_check
      _
    $region3: #{net_forward.1} parent=1 // pred_check_branch
      %18 = sbr.rel (0) target = $region5
    $region4: #{net_forward.1} parent=1 // pred_region
      %s20 = ssub.s32 16, 16
      %21 = vsyncadd [#allocation4], %s20
      %s23 = sshll.u32 %s0, 4
      %s24 = int_to_ptr.vmem [resolvable:$true] %s23
      %26 = dma.vmem_to_smem %s24, 16, [#allocation2], [#allocation4]
    $region5: #{net_forward.1} parent=1 // pred_fallthru
      _
    // Predicated region
    $region6: #{net_forward.1} parent=1 // pred_check
      _
    $region7: #{net_forward.1} parent=1 // pred_check_branch
      %28 = sbr.rel (0) target = $region9
    $region8: #{net_forward.1} parent=1 // pred_region
      _
    $region9: #{net_forward.1} parent=1 // pred_fallthru
      _
    // Predicated region
    $region10: #{net_forward.1} parent=1 // pred_check
      _
    $region11: #{net_forward.1} parent=1 // pred_check_branch
      %30 = sbr.rel (0) target = $region13
    $region12: #{net_forward.1} parent=1 // pred_region
      _
    $region13: #{net_forward.1} parent=1 // pred_fallthru
      _
    // Predicated region
    $region14: #{net_forward.1} parent=1 // pred_check
      _
    $region15: #{net_forward.1} parent=1 // pred_check_branch
      %32 = sbr.rel (0) target = $region17
    $region16: #{net_forward.1} parent=1 // pred_region
      _
    $region17: #{net_forward.1} parent=1 // pred_fallthru
      _
    // Predicated region
    $region18: #{net_forward.1} parent=1 // pred_check
      _
    $region19: #{net_forward.1} parent=1 // pred_check_branch
      %34 = sbr.rel (0) target = $region21
    $region20: #{net_forward.1} parent=1 // pred_region
      _
    $region21: #{net_forward.1} parent=1 // pred_fallthru
      _
    // Predicated region
    $region22: #{net_forward.1} parent=1 // pred_check
      _
    $region23: #{net_forward.1} parent=1 // pred_check_branch
      %36 = sbr.rel (0) target = $region25
    $region24: #{net_forward.1} parent=1 // pred_region
      _
    $region25: #{net_forward.1} parent=1 // pred_fallthru
      _
    // Predicated region
    $region26: #{net_forward.1} parent=1 // pred_check
      _
    $region27: #{net_forward.1} parent=1 // pred_check_branch
      %38 = sbr.rel (0) target = $region29
    $region28: #{net_forward.1} parent=1 // pred_region
      _
    $region29: #{net_forward.1} parent=1 // pred_fallthru
      _
    // Predicated region
    $region30: #{net_forward.1} parent=1 // pred_check
      _
    $region31: #{net_forward.1} parent=1 // pred_check_branch
      %40 = sbr.rel (0) target = $region33
    $region32: #{net_forward.1} parent=1 // pred_region
      _
    $region33: #{net_forward.1} parent=1 // pred_fallthru
      _
    // Predicated region
    $region34: #{net_forward.1} parent=1 // pred_check
      _
    $region35: #{net_forward.1} parent=1 // pred_check_branch
      %42 = sbr.rel (0) target = $region37
    $region36: #{net_forward.1} parent=1 // pred_region
      _
    $region37: #{net_forward.1} parent=1 // pred_fallthru
      _
    // Predicated region
    $region38: #{net_forward.1} parent=1 // pred_check
      _
    $region39: #{net_forward.1} parent=1 // pred_check_branch
      %44 = sbr.rel (0) target = $region41
    $region40: #{net_forward.1} parent=1 // pred_region
      _
    $region41: #{net_forward.1} parent=1 // pred_fallthru
      _
    // Predicated region
    $region42: #{net_forward.1} parent=1 // pred_check
      _
    $region43: #{net_forward.1} parent=1 // pred_check_branch
      %46 = sbr.rel (0) target = $region45
    $region44: #{net_forward.1} parent=1 // pred_region
      %47 = dma.done [#allocation4], 16
    $region45: #{net_forward.1} parent=1 // pred_fallthru
      _
    %48 = sfence
    %v49 = vld [vmem:[%s1] sm:$0xff]
    %v50 = vld [vmem:[%s1 + $0x8] sm:$0xf]
    %v51 = vld [vmem:[%s2] sm:$0xff]
    %v52 = vld [vmem:[%s2 + $0x8] sm:$0xf]
    %s53 = scalar_lea.vmem %s2, 16
    %v54 = vld [vmem:[%s53] sm:$0xff]
    %v55 = vld [vmem:[%s53 + $0x8] sm:$0xf]
    %v56 = vld [vmem:[%s7] sm:$0xff]
    %vm57 = vcmp.gt.f32.partialorder %v51, 0.0
    %vm58 = vcmp.gt.f32.partialorder %v52, 0.0
    %v59 = vsel %vm57, 0.0, -1e+30
    %v60 = vsel %vm58, 0.0, -1e+30
    %s61 = sld [smem:[#allocation2]]
    %v62 = vld [vmem:[%s4] sm:$0xf]
    %vm63 = vcmask 31744
    %v65 = vsel %vm63, %v49, 0
    %v68 = vsel %vm63, %v50, 0
    %vm70 = vcmask 1043456
    %v72 = vsel %vm70, %v62, 0
    %74 = vmatprep.subr.mxu0 0.0
    %75 = vmatpush1.msra.mxu0 %v72
    %76 = vmatprep.subr.mxu0 0.0
    %77 = vmatpush1.msra.mxu0 0.0
    %78 = vmatprep.subr.mxu0 0.0
    %79 = vmatpush1.msra.mxu0 0.0
    %80 = vmatprep.subr.mxu0 0.0
    %81 = vmatpush1.msra.mxu0 0.0
    %82 = vmatprep.subr.mxu0 0.0
    %83 = vmatpush1.msra.mxu0 0.0
    %84 = vmatprep.subr.mxu0 0.0
    %85 = vmatpush1.msra.mxu0 0.0
    %86 = vmatprep.subr.mxu0 0.0
    %87 = vmatpush1.msra.mxu0 0.0
    %88 = vmatprep.subr.mxu0 0.0
    %89 = vmatpush1.msra.mxu0 0.0
    %90 = vmatprep.subr.mxu0 0.0
    %91 = vmatpush1.msra.mxu0 0.0
    %92 = vmatprep.subr.mxu0 0.0
    %93 = vmatpush1.msra.mxu0 0.0
    %94 = vmatprep.subr.mxu0 0.0
    %95 = vmatpush1.msra.mxu0 0.0
    %96 = vmatprep.subr.mxu0 0.0
    %97 = vmatpush1.msra.mxu0 0.0
    %98 = vmatprep.subr.mxu0 0.0
    %99 = vmatpush1.msra.mxu0 0.0
    %100 = vmatprep.subr.mxu0 0.0
    %101 = vmatpush1.msra.mxu0 0.0
    %102 = vmatprep.subr.mxu0 0.0
    %103 = vmatpush1.msra.mxu0 0.0
    %104 = vmatprep.subr.mxu0 0.0
    %105 = vmatpush1.msra.mxu0 0.0
    %106 = vmatprep.subr.mxu0 0.0
    %107 = vmatpush1.msra.mxu0 0.0
    %108 = vmatprep.subr.mxu0 0.0
    %109 = vmatpush1.msra.mxu0 0.0
    %110 = vmatprep.subr.mxu0 0.0
    %111 = vmatpush1.msra.mxu0 0.0
    %112 = vmatprep.subr.mxu0 0.0
    %113 = vmatpush1.msra.mxu0 0.0
    %114 = vmatprep.subr.mxu0 0.0
    %115 = vmatpush1.msra.mxu0 0.0
    %116 = vmatprep.subr.mxu0 0.0
    %117 = vmatpush1.msra.mxu0 0.0
    %118 = vmatprep.subr.mxu0 0.0
    %119 = vmatpush1.msra.mxu0 0.0
    %120 = vmatprep.subr.mxu0 0.0
    %121 = vmatpush1.msra.mxu0 0.0
    %122 = vmatprep.subr.mxu0 0.0
    %123 = vmatpush1.msra.mxu0 0.0
    %124 = vmatprep.subr.mxu0 0.0
    %125 = vmatpush1.msra.mxu0 0.0
    %126 = vmatprep.subr.mxu0 0.0
    %127 = vmatpush1.msra.mxu0 0.0
    %128 = vmatprep.subr.mxu0 0.0
    %129 = vmatpush1.msra.mxu0 0.0
    %130 = vmatprep.subr.mxu0 0.0
    %131 = vmatpush1.msra.mxu0 0.0
    %132 = vmatprep.subr.mxu0 0.0
    %133 = vmatpush1.msra.mxu0 0.0
    %134 = vmatprep.subr.mxu0 0.0
    %135 = vmatpush1.msra.mxu0 0.0
    %136 = vmatprep.subr.mxu0 0.0
    %137 = vmatpush1.msra.mxu0 0.0
    %138 = vmatprep.mubr.f32.mxu0 0.0
    %139 = vmatmul.mubr.f32.gmra.mrb[0].mxu0 %v65
    %v140 = vpop.f32.mrb[0].mxu0
    %v141 = vadd.f32 0.0, %v140
    %v142 = vpop.f32.mrb[0].mxu0
    %143 = vmatprep.mubr.f32.mxu0 0.0
    %144 = vmatmul.mubr.f32.gmra.mrb[0].mxu0 %v68
    %v145 = vpop.f32.mrb[0].mxu0
    %v146 = vadd.f32 0.0, %v145
    %v147 = vpop.f32.mrb[0].mxu0
    %148 = vdwg.mxu0
    %151 = vrot.lane.b32.xlu0 %v141, 96
    %v152 = vpop.permute.xlu0 %151
    %153 = vrot.lane.b32.xlu0 %v146, 96
    %v154 = vpop.permute.xlu0 %153
    %157 = vxpose.xlu0.b32.start [1/16] %v152, 128
    %158 = vxpose.xlu0.b32.cont [2/16] %v154, 128
    %159 = vxpose.xlu0.b32.cont [3/16] 0.0, 128
    %160 = vxpose.xlu0.b32.cont [4/16] 0.0, 128
    %161 = vxpose.xlu0.b32.cont [5/16] 0.0, 128
    %162 = vxpose.xlu0.b32.cont [6/16] 0.0, 128
    %163 = vxpose.xlu0.b32.cont [7/16] 0.0, 128
    %164 = vxpose.xlu0.b32.cont [8/16] 0.0, 128
    %165 = vxpose.xlu0.b32.cont [9/16] 0.0, 128
    %166 = vxpose.xlu0.b32.cont [10/16] 0.0, 128
    %167 = vxpose.xlu0.b32.cont [11/16] 0.0, 128
    %168 = vxpose.xlu0.b32.cont [12/16] 0.0, 128
    %169 = vxpose.xlu0.b32.cont [13/16] 0.0, 128
    %170 = vxpose.xlu0.b32.cont [14/16] 0.0, 128
    %171 = vxpose.xlu0.b32.cont [15/16] 0.0, 128
    %172 = vxpose.xlu0.b32.end [16/16] 0.0, 128
    %v173 = vpop.trf.xlu0
    %v174 = vpop.trf.xlu0
    %v175 = vpop.trf.xlu0
    %v176 = vpop.trf.xlu0
    %v177 = vpop.trf.xlu0
    %v178 = vpop.trf.xlu0
    %v179 = vpop.trf.xlu0
    %v180 = vpop.trf.xlu0
    %v181 = vpop.trf.xlu0
    %v182 = vpop.trf.xlu0
    %v183 = vpop.trf.xlu0
    %v184 = vpop.trf.xlu0
    %v185 = vpop.trf.xlu0
    %v186 = vpop.trf.xlu0
    %v187 = vpop.trf.xlu0
    %v188 = vpop.trf.xlu0
    %189 = vset.pattern.permute.xlu0 33
    %190 = vperm.xlu0 %189, %v141
    %v191 = vpop.permute.xlu0 %190
    %193 = vset.pattern.permute.xlu0 33
    %194 = vperm.xlu0 %193, %v146
    %v195 = vpop.permute.xlu0 %194
    %v197 = vlaneseq
    %v198 = vshrl.u32 %v197, 7
    %v199 = vsub.s32 0, %v198
    %v200 = vrot.slane %v173, %v199
    %v201 = vadd.f32 %v191, %v200
    %v202 = vadd.f32 %v195, %v200
    %v203 = vstv %s61
    %v204 = vmul.f32 %v54, %v203
    %v205 = vmul.f32 %v55, %v203
    %v206 = vadd.f32 %v201, %v204
    %v207 = vadd.f32 %v202, %v205
    %v208 = vmul.f32 %v206, 0.2
    %v209 = vmul.f32 %v207, 0.2
    %v210 = vmax.f32 %v206, %v208
    %v211 = vmax.f32 %v207, %v209
    %v212 = vadd.f32 %v210, %v59
    %v213 = vadd.f32 %v211, %v60
    %vm214 = vcmask 97280
    %v215 = vsel %vm214, %v212, -inf
    %216 = vmax.xlane.f32.xlu0 %v215
    %v217 = vpop.xlane.xlu0 %216
    %vm218 = vcmask 93184
    %v219 = vsel %vm218, %v213, -inf
    %220 = vmax.xlane.f32.xlu0 %v219
    %v221 = vpop.xlane.xlu0 %220
    %v222 = vsub.f32 %v212, %v217
    %v223 = vsub.f32 %v213, %v221
    %v224 = vmul.f32 %v222, 1.442695
    %v225 = vpow.pop %v224
    %v226 = vmul.f32 %v223, 1.442695
    %v227 = vpow.pop %v226
    %v228 = vsel %vm214, %v225, 0.0
    %229 = vadd.xlane.f32.xlu0 %v228
    %v230 = vpop.xlane.xlu0 %229
    %v231 = vsel %vm218, %v227, 0.0
    %232 = vadd.xlane.f32.xlu0 %v231
    %v233 = vpop.xlane.xlu0 %232
    %v234 = vrcp.pop %v230
    %v235 = vrcp.pop %v233
    %v236 = vmul.f32 %v225, %v234
    %v237 = vmul.f32 %v227, %v235
    %v239 = vsel %vm214, %v236, 0
    %v242 = vsel %vm214, %v237, 0
    %v244 = vsel %vm70, %v146, 0
    %246 = vmatprep.subr.mxu0 0.0
    %247 = vmatpush1.msra.mxu0 %v141
    %248 = vmatprep.subr.mxu0 0.0
    %249 = vmatpush1.msra.mxu0 %v244
    %250 = vmatprep.subr.mxu0 0.0
    %251 = vmatpush1.msra.mxu0 0.0
    %252 = vmatprep.subr.mxu0 0.0
    %253 = vmatpush1.msra.mxu0 0.0
    %254 = vmatprep.subr.mxu0 0.0
    %255 = vmatpush1.msra.mxu0 0.0
    %256 = vmatprep.subr.mxu0 0.0
    %257 = vmatpush1.msra.mxu0 0.0
    %258 = vmatprep.subr.mxu0 0.0
    %259 = vmatpush1.msra.mxu0 0.0
    %260 = vmatprep.subr.mxu0 0.0
    %261 = vmatpush1.msra.mxu0 0.0
    %262 = vmatprep.subr.mxu0 0.0
    %263 = vmatpush1.msra.mxu0 0.0
    %264 = vmatprep.subr.mxu0 0.0
    %265 = vmatpush1.msra.mxu0 0.0
    %266 = vmatprep.subr.mxu0 0.0
    %267 = vmatpush1.msra.mxu0 0.0
    %268 = vmatprep.subr.mxu0 0.0
    %269 = vmatpush1.msra.mxu0 0.0
    %270 = vmatprep.subr.mxu0 0.0
    %271 = vmatpush1.msra.mxu0 0.0
    %272 = vmatprep.subr.mxu0 0.0
    %273 = vmatpush1.msra.mxu0 0.0
    %274 = vmatprep.subr.mxu0 0.0
    %275 = vmatpush1.msra.mxu0 0.0
    %276 = vmatprep.subr.mxu0 0.0
    %277 = vmatpush1.msra.mxu0 0.0
    %278 = vmatprep.subr.mxu0 0.0
    %279 = vmatpush1.msra.mxu0 0.0
    %280 = vmatprep.subr.mxu0 0.0
    %281 = vmatpush1.msra.mxu0 0.0
    %282 = vmatprep.subr.mxu0 0.0
    %283 = vmatpush1.msra.mxu0 0.0
    %284 = vmatprep.subr.mxu0 0.0
    %285 = vmatpush1.msra.mxu0 0.0
    %286 = vmatprep.subr.mxu0 0.0
    %287 = vmatpush1.msra.mxu0 0.0
    %288 = vmatprep.subr.mxu0 0.0
    %289 = vmatpush1.msra.mxu0 0.0
    %290 = vmatprep.subr.mxu0 0.0
    %291 = vmatpush1.msra.mxu0 0.0
    %292 = vmatprep.subr.mxu0 0.0
    %293 = vmatpush1.msra.mxu0 0.0
    %294 = vmatprep.subr.mxu0 0.0
    %295 = vmatpush1.msra.mxu0 0.0
    %296 = vmatprep.subr.mxu0 0.0
    %297 = vmatpush1.msra.mxu0 0.0
    %298 = vmatprep.subr.mxu0 0.0
    %299 = vmatpush1.msra.mxu0 0.0
    %300 = vmatprep.subr.mxu0 0.0
    %301 = vmatpush1.msra.mxu0 0.0
    %302 = vmatprep.subr.mxu0 0.0
    %303 = vmatpush1.msra.mxu0 0.0
    %304 = vmatprep.subr.mxu0 0.0
    %305 = vmatpush1.msra.mxu0 0.0
    %306 = vmatprep.subr.mxu0 0.0
    %307 = vmatpush1.msra.mxu0 0.0
    %308 = vmatprep.subr.mxu0 0.0
    %309 = vmatpush1.msra.mxu0 0.0
    %310 = vmatprep.mubr.f32.mxu0 0.0
    %311 = vmatmul.mubr.f32.gmra.mrb[0].mxu0 %v239
    %v312 = vpop.f32.mrb[0].mxu0
    %v313 = vadd.f32 0.0, %v312
    %v314 = vpop.f32.mrb[0].mxu0
    %315 = vmatprep.mubr.f32.mxu0 0.0
    %316 = vmatmul.mubr.f32.gmra.mrb[0].mxu0 %v242
    %v317 = vpop.f32.mrb[0].mxu0
    %v318 = vadd.f32 0.0, %v317
    %v319 = vpop.f32.mrb[0].mxu0
    %320 = vdwg.mxu0
    %vm321 = vcmask 261120
    %v322 = vsel %vm321, %v313, 0.0
    %vm323 = vcmask 257024
    %v324 = vsel %vm323, %v318, 0.0
    %v325 = vadd.f32 %v322, %v324
    %v326 = vrot.slane %v325, 4
    %v327 = vadd.f32 %v325, %v326
    %v328 = vrot.slane %v327, 2
    %v329 = vadd.f32 %v327, %v328
    %v330 = vrot.slane %v329, 1
    %v331 = vadd.f32 %v329, %v330
    %v332 = vmul.f32 %v313, %v313
    %v333 = vmul.f32 %v318, %v318
    %v334 = vsel %vm321, %v332, 0.0
    %v335 = vsel %vm323, %v333, 0.0
    %v336 = vadd.f32 %v334, %v335
    %v337 = vrot.slane %v336, 4
    %v338 = vadd.f32 %v336, %v337
    %v339 = vrot.slane %v338, 2
    %v340 = vadd.f32 %v338, %v339
    %v341 = vrot.slane %v340, 1
    %v342 = vadd.f32 %v340, %v341
    %v343 = vmul.f32 %v331, 0.083333336
    %v344 = vmul.f32 %v342, 0.083333336
    %v345 = vmul.f32 %v343, %v343
    %v346 = vsub.f32 %v344, %v345
    %v347 = vmax.f32 %v346, 0.0
    %v348 = vsub.f32 %v313, %v343
    %v349 = vsub.f32 %v318, %v343
    %v350 = vadd.f32 %v347, 1e-05
    %v351 = vrsqrt.pop %v350
    %v352 = vmul.f32 %v348, %v351
    %v353 = vmul.f32 %v349, %v351
    %v354 = vlaneseq
    %v355 = vshrl.u32 %v354, 7
    %v356 = vsub.s32 0, %v355
    %v357 = vrot.slane %v56, %v356
    %v358 = vmul.f32 %v357, %v352
    %v359 = vmul.f32 %v357, %v353
    %v360 = vlaneseq
    %v361 = vshrl.u32 %v360, 7
    %v362 = vsub.s32 1, %v361
    %v363 = vrot.slane %v56, %v362
    %v364 = vadd.f32 %v358, %v363
    %v365 = vadd.f32 %v359, %v363
    %366 = vrot.lane.b32.xlu0 %v49, 32
    %v367 = vpop.permute.xlu0 %366
    %368 = vrot.lane.b32.xlu0 %v50, 32
    %v369 = vpop.permute.xlu0 %368
    %v372 = vsel %vm321, %v364, %v367
    %v373 = vsel %vm321, %v365, %v369
    %s374 = sld [smem:[#allocation2 + $0x1]]
    %v375 = vld [vmem:[%s5] sm:$0xff]
    %v376 = vld [vmem:[%s5 + $0x8] sm:$0xff]
    %v377 = vld [vmem:[%s5 + $0x10] sm:$0xff]
    %v378 = vld [vmem:[%s5 + $0x18] sm:$0xff]
    %v379 = vld [vmem:[%s5 + $0x20] sm:$0xf]
    %vm380 = vcmask 293888
    %v382 = vsel %vm380, %v372, 0
    %v385 = vsel %vm380, %v373, 0
    %v388 = vsel %vm70, %v379, 0
    %390 = vmatprep.subr.mxu0 0.0
    %391 = vmatpush1.msra.mxu0 %v375
    %392 = vmatprep.subr.mxu0 0.0
    %393 = vmatpush1.msra.mxu0 %v376
    %394 = vmatprep.subr.mxu0 0.0
    %395 = vmatpush1.msra.mxu0 %v377
    %396 = vmatprep.subr.mxu0 0.0
    %397 = vmatpush1.msra.mxu0 %v378
    %398 = vmatprep.subr.mxu0 0.0
    %399 = vmatpush1.msra.mxu0 %v388
    %400 = vmatprep.subr.mxu0 0.0
    %401 = vmatpush1.msra.mxu0 0.0
    %402 = vmatprep.subr.mxu0 0.0
    %403 = vmatpush1.msra.mxu0 0.0
    %404 = vmatprep.subr.mxu0 0.0
    %405 = vmatpush1.msra.mxu0 0.0
    %406 = vmatprep.subr.mxu0 0.0
    %407 = vmatpush1.msra.mxu0 0.0
    %408 = vmatprep.subr.mxu0 0.0
    %409 = vmatpush1.msra.mxu0 0.0
    %410 = vmatprep.subr.mxu0 0.0
    %411 = vmatpush1.msra.mxu0 0.0
    %412 = vmatprep.subr.mxu0 0.0
    %413 = vmatpush1.msra.mxu0 0.0
    %414 = vmatprep.subr.mxu0 0.0
    %415 = vmatpush1.msra.mxu0 0.0
    %416 = vmatprep.subr.mxu0 0.0
    %417 = vmatpush1.msra.mxu0 0.0
    %418 = vmatprep.subr.mxu0 0.0
    %419 = vmatpush1.msra.mxu0 0.0
    %420 = vmatprep.subr.mxu0 0.0
    %421 = vmatpush1.msra.mxu0 0.0
    %422 = vmatprep.subr.mxu0 0.0
    %423 = vmatpush1.msra.mxu0 0.0
    %424 = vmatprep.subr.mxu0 0.0
    %425 = vmatpush1.msra.mxu0 0.0
    %426 = vmatprep.subr.mxu0 0.0
    %427 = vmatpush1.msra.mxu0 0.0
    %428 = vmatprep.subr.mxu0 0.0
    %429 = vmatpush1.msra.mxu0 0.0
    %430 = vmatprep.subr.mxu0 0.0
    %431 = vmatpush1.msra.mxu0 0.0
    %432 = vmatprep.subr.mxu0 0.0
    %433 = vmatpush1.msra.mxu0 0.0
    %434 = vmatprep.subr.mxu0 0.0
    %435 = vmatpush1.msra.mxu0 0.0
    %436 = vmatprep.subr.mxu0 0.0
    %437 = vmatpush1.msra.mxu0 0.0
    %438 = vmatprep.subr.mxu0 0.0
    %439 = vmatpush1.msra.mxu0 0.0
    %440 = vmatprep.subr.mxu0 0.0
    %441 = vmatpush1.msra.mxu0 0.0
    %442 = vmatprep.subr.mxu0 0.0
    %443 = vmatpush1.msra.mxu0 0.0
    %444 = vmatprep.subr.mxu0 0.0
    %445 = vmatpush1.msra.mxu0 0.0
    %446 = vmatprep.subr.mxu0 0.0
    %447 = vmatpush1.msra.mxu0 0.0
    %448 = vmatprep.subr.mxu0 0.0
    %449 = vmatpush1.msra.mxu0 0.0
    %450 = vmatprep.subr.mxu0 0.0
    %451 = vmatpush1.msra.mxu0 0.0
    %452 = vmatprep.subr.mxu0 0.0
    %453 = vmatpush1.msra.mxu0 0.0
    %454 = vmatprep.mubr.f32.mxu0 0.0
    %455 = vmatmul.mubr.f32.gmra.mrb[0].mxu0 %v382
    %v456 = vpop.f32.mrb[0].mxu0
    %v457 = vadd.f32 0.0, %v456
    %v458 = vpop.f32.mrb[0].mxu0
    %459 = vmatprep.mubr.f32.mxu0 0.0
    %460 = vmatmul.mubr.f32.gmra.mrb[0].mxu0 %v385
    %v461 = vpop.f32.mrb[0].mxu0
    %v462 = vadd.f32 0.0, %v461
    %v463 = vpop.f32.mrb[0].mxu0
    %464 = vdwg.mxu0
    %467 = vrot.lane.b32.xlu0 %v457, 92
    %v468 = vpop.permute.xlu0 %467
    %469 = vrot.lane.b32.xlu0 %v462, 92
    %v470 = vpop.permute.xlu0 %469
    %473 = vxpose.xlu0.b32.start [1/16] %v468, 128
    %474 = vxpose.xlu0.b32.cont [2/16] %v470, 128
    %475 = vxpose.xlu0.b32.cont [3/16] 0.0, 128
    %476 = vxpose.xlu0.b32.cont [4/16] 0.0, 128
    %477 = vxpose.xlu0.b32.cont [5/16] 0.0, 128
    %478 = vxpose.xlu0.b32.cont [6/16] 0.0, 128
    %479 = vxpose.xlu0.b32.cont [7/16] 0.0, 128
    %480 = vxpose.xlu0.b32.cont [8/16] 0.0, 128
    %481 = vxpose.xlu0.b32.cont [9/16] 0.0, 128
    %482 = vxpose.xlu0.b32.cont [10/16] 0.0, 128
    %483 = vxpose.xlu0.b32.cont [11/16] 0.0, 128
    %484 = vxpose.xlu0.b32.cont [12/16] 0.0, 128
    %485 = vxpose.xlu0.b32.cont [13/16] 0.0, 128
    %486 = vxpose.xlu0.b32.cont [14/16] 0.0, 128
    %487 = vxpose.xlu0.b32.cont [15/16] 0.0, 128
    %488 = vxpose.xlu0.b32.end [16/16] 0.0, 128
    %v489 = vpop.trf.xlu0
    %v490 = vpop.trf.xlu0
    %v491 = vpop.trf.xlu0
    %v492 = vpop.trf.xlu0
    %v493 = vpop.trf.xlu0
    %v494 = vpop.trf.xlu0
    %v495 = vpop.trf.xlu0
    %v496 = vpop.trf.xlu0
    %v497 = vpop.trf.xlu0
    %v498 = vpop.trf.xlu0
    %v499 = vpop.trf.xlu0
    %v500 = vpop.trf.xlu0
    %v501 = vpop.trf.xlu0
    %v502 = vpop.trf.xlu0
    %v503 = vpop.trf.xlu0
    %v504 = vpop.trf.xlu0
    %505 = vset.pattern.permute.xlu0 37
    %506 = vperm.xlu0 %505, %v457
    %v507 = vpop.permute.xlu0 %506
    %509 = vset.pattern.permute.xlu0 37
    %510 = vperm.xlu0 %509, %v462
    %v511 = vpop.permute.xlu0 %510
    %v513 = vlaneseq
    %v514 = vshrl.u32 %v513, 7
    %v515 = vsub.s32 0, %v514
    %v516 = vrot.slane %v489, %v515
    %v517 = vadd.f32 %v507, %v516
    %v518 = vadd.f32 %v511, %v516
    %v519 = vstv %s374
    %v520 = vmul.f32 %v54, %v519
    %v521 = vmul.f32 %v55, %v519
    %v522 = vadd.f32 %v517, %v520
    %v523 = vadd.f32 %v518, %v521
    %v524 = vmul.f32 %v522, 0.2
    %v525 = vmul.f32 %v523, 0.2
    %v526 = vmax.f32 %v522, %v524
    %v527 = vmax.f32 %v523, %v525
    %v528 = vadd.f32 %v526, %v59
    %v529 = vadd.f32 %v527, %v60
    %v530 = vsel %vm214, %v528, -inf
    %531 = vmax.xlane.f32.xlu0 %v530
    %v532 = vpop.xlane.xlu0 %531
    %v533 = vsel %vm218, %v529, -inf
    %534 = vmax.xlane.f32.xlu0 %v533
    %v535 = vpop.xlane.xlu0 %534
    %v536 = vsub.f32 %v528, %v532
    %v537 = vsub.f32 %v529, %v535
    %v538 = vmul.f32 %v536, 1.442695
    %v539 = vpow.pop %v538
    %v540 = vmul.f32 %v537, 1.442695
    %v541 = vpow.pop %v540
    %v542 = vsel %vm214, %v539, 0.0
    %543 = vadd.xlane.f32.xlu0 %v542
    %v544 = vpop.xlane.xlu0 %543
    %v545 = vsel %vm218, %v541, 0.0
    %546 = vadd.xlane.f32.xlu0 %v545
    %v547 = vpop.xlane.xlu0 %546
    %v548 = vrcp.pop %v544
    %v549 = vrcp.pop %v547
    %v550 = vmul.f32 %v539, %v548
    %v551 = vmul.f32 %v541, %v549
    %v553 = vsel %vm214, %v550, 0
    %v556 = vsel %vm214, %v551, 0
    %v558 = vsel %vm70, %v462, 0
    %560 = vmatprep.subr.mxu0 0.0
    %561 = vmatpush1.msra.mxu0 %v457
    %562 = vmatprep.subr.mxu0 0.0
    %563 = vmatpush1.msra.mxu0 %v558
    %564 = vmatprep.subr.mxu0 0.0
    %565 = vmatpush1.msra.mxu0 0.0
    %566 = vmatprep.subr.mxu0 0.0
    %567 = vmatpush1.msra.mxu0 0.0
    %568 = vmatprep.subr.mxu0 0.0
    %569 = vmatpush1.msra.mxu0 0.0
    %570 = vmatprep.subr.mxu0 0.0
    %571 = vmatpush1.msra.mxu0 0.0
    %572 = vmatprep.subr.mxu0 0.0
    %573 = vmatpush1.msra.mxu0 0.0
    %574 = vmatprep.subr.mxu0 0.0
    %575 = vmatpush1.msra.mxu0 0.0
    %576 = vmatprep.subr.mxu0 0.0
    %577 = vmatpush1.msra.mxu0 0.0
    %578 = vmatprep.subr.mxu0 0.0
    %579 = vmatpush1.msra.mxu0 0.0
    %580 = vmatprep.subr.mxu0 0.0
    %581 = vmatpush1.msra.mxu0 0.0
    %582 = vmatprep.subr.mxu0 0.0
    %583 = vmatpush1.msra.mxu0 0.0
    %584 = vmatprep.subr.mxu0 0.0
    %585 = vmatpush1.msra.mxu0 0.0
    %586 = vmatprep.subr.mxu0 0.0
    %587 = vmatpush1.msra.mxu0 0.0
    %588 = vmatprep.subr.mxu0 0.0
    %589 = vmatpush1.msra.mxu0 0.0
    %590 = vmatprep.subr.mxu0 0.0
    %591 = vmatpush1.msra.mxu0 0.0
    %592 = vmatprep.subr.mxu0 0.0
    %593 = vmatpush1.msra.mxu0 0.0
    %594 = vmatprep.subr.mxu0 0.0
    %595 = vmatpush1.msra.mxu0 0.0
    %596 = vmatprep.subr.mxu0 0.0
    %597 = vmatpush1.msra.mxu0 0.0
    %598 = vmatprep.subr.mxu0 0.0
    %599 = vmatpush1.msra.mxu0 0.0
    %600 = vmatprep.subr.mxu0 0.0
    %601 = vmatpush1.msra.mxu0 0.0
    %602 = vmatprep.subr.mxu0 0.0
    %603 = vmatpush1.msra.mxu0 0.0
    %604 = vmatprep.subr.mxu0 0.0
    %605 = vmatpush1.msra.mxu0 0.0
    %606 = vmatprep.subr.mxu0 0.0
    %607 = vmatpush1.msra.mxu0 0.0
    %608 = vmatprep.subr.mxu0 0.0
    %609 = vmatpush1.msra.mxu0 0.0
    %610 = vmatprep.subr.mxu0 0.0
    %611 = vmatpush1.msra.mxu0 0.0
    %612 = vmatprep.subr.mxu0 0.0
    %613 = vmatpush1.msra.mxu0 0.0
    %614 = vmatprep.subr.mxu0 0.0
    %615 = vmatpush1.msra.mxu0 0.0
    %616 = vmatprep.subr.mxu0 0.0
    %617 = vmatpush1.msra.mxu0 0.0
    %618 = vmatprep.subr.mxu0 0.0
    %619 = vmatpush1.msra.mxu0 0.0
    %620 = vmatprep.subr.mxu0 0.0
    %621 = vmatpush1.msra.mxu0 0.0
    %622 = vmatprep.subr.mxu0 0.0
    %623 = vmatpush1.msra.mxu0 0.0
    %624 = vmatprep.mubr.f32.mxu0 0.0
    %625 = vmatmul.mubr.f32.gmra.mrb[0].mxu0 %v553
    %v626 = vpop.f32.mrb[0].mxu0
    %v627 = vadd.f32 0.0, %v626
    %v628 = vpop.f32.mrb[0].mxu0
    %629 = vmatprep.mubr.f32.mxu0 0.0
    %630 = vmatmul.mubr.f32.gmra.mrb[0].mxu0 %v556
    %v631 = vpop.f32.mrb[0].mxu0
    %v632 = vadd.f32 0.0, %v631
    %v633 = vpop.f32.mrb[0].mxu0
    %634 = vdwg.mxu0
    %v635 = vsel %vm380, %v627, 0.0
    %vm636 = vcmask 289792
    %v637 = vsel %vm636, %v632, 0.0
    %v638 = vadd.f32 %v635, %v637
    %v639 = vrot.slane %v638, 4
    %v640 = vadd.f32 %v638, %v639
    %v641 = vrot.slane %v640, 2
    %v642 = vadd.f32 %v640, %v641
    %v643 = vrot.slane %v642, 1
    %v644 = vadd.f32 %v642, %v643
    %v645 = vmul.f32 %v627, %v627
    %v646 = vmul.f32 %v632, %v632
    %v647 = vsel %vm380, %v645, 0.0
    %v648 = vsel %vm636, %v646, 0.0
    %v649 = vadd.f32 %v647, %v648
    %v650 = vrot.slane %v649, 4
    %v651 = vadd.f32 %v649, %v650
    %v652 = vrot.slane %v651, 2
    %v653 = vadd.f32 %v651, %v652
    %v654 = vrot.slane %v653, 1
    %v655 = vadd.f32 %v653, %v654
    %v656 = vmul.f32 %v644, 0.083333336
    %v657 = vmul.f32 %v655, 0.083333336
    %v658 = vmul.f32 %v656, %v656
    %v659 = vsub.f32 %v657, %v658
    %v660 = vmax.f32 %v659, 0.0
    %v661 = vsub.f32 %v627, %v656
    %v662 = vsub.f32 %v632, %v656
    %v663 = vadd.f32 %v660, 1e-05
    %v664 = vrsqrt.pop %v663
    %v665 = vmul.f32 %v661, %v664
    %v666 = vmul.f32 %v662, %v664
    %v667 = vlaneseq
    %v668 = vshrl.u32 %v667, 7
    %v669 = vsub.s32 2, %v668
    %v670 = vrot.slane %v56, %v669
    %v671 = vmul.f32 %v670, %v665
    %v672 = vmul.f32 %v670, %v666
    %v673 = vlaneseq
    %v674 = vshrl.u32 %v673, 7
    %v675 = vsub.s32 3, %v674
    %v676 = vrot.slane %v56, %v675
    %v677 = vadd.f32 %v671, %v676
    %v678 = vadd.f32 %v672, %v676
    %v679 = vadd.f32 %v677, %v372
    %v680 = vadd.f32 %v678, %v373
    %s681 = sld [smem:[#allocation2 + $0x2]]
    %v682 = vld [vmem:[%s6] sm:$0xff]
    %v683 = vld [vmem:[%s6 + $0x8] sm:$0xff]
    %v684 = vld [vmem:[%s6 + $0x10] sm:$0xff]
    %v685 = vld [vmem:[%s6 + $0x18] sm:$0xff]
    %v686 = vld [vmem:[%s6 + $0x20] sm:$0xf]
    %v688 = vsel %vm380, %v679, 0
    %v691 = vsel %vm380, %v680, 0
    %v694 = vsel %vm70, %v686, 0
    %696 = vmatprep.subr.mxu0 0.0
    %697 = vmatpush1.msra.mxu0 %v682
    %698 = vmatprep.subr.mxu0 0.0
    %699 = vmatpush1.msra.mxu0 %v683
    %700 = vmatprep.subr.mxu0 0.0
    %701 = vmatpush1.msra.mxu0 %v684
    %702 = vmatprep.subr.mxu0 0.0
    %703 = vmatpush1.msra.mxu0 %v685
    %704 = vmatprep.subr.mxu0 0.0
    %705 = vmatpush1.msra.mxu0 %v694
    %706 = vmatprep.subr.mxu0 0.0
    %707 = vmatpush1.msra.mxu0 0.0
    %708 = vmatprep.subr.mxu0 0.0
    %709 = vmatpush1.msra.mxu0 0.0
    %710 = vmatprep.subr.mxu0 0.0
    %711 = vmatpush1.msra.mxu0 0.0
    %712 = vmatprep.subr.mxu0 0.0
    %713 = vmatpush1.msra.mxu0 0.0
    %714 = vmatprep.subr.mxu0 0.0
    %715 = vmatpush1.msra.mxu0 0.0
    %716 = vmatprep.subr.mxu0 0.0
    %717 = vmatpush1.msra.mxu0 0.0
    %718 = vmatprep.subr.mxu0 0.0
    %719 = vmatpush1.msra.mxu0 0.0
    %720 = vmatprep.subr.mxu0 0.0
    %721 = vmatpush1.msra.mxu0 0.0
    %722 = vmatprep.subr.mxu0 0.0
    %723 = vmatpush1.msra.mxu0 0.0
    %724 = vmatprep.subr.mxu0 0.0
    %725 = vmatpush1.msra.mxu0 0.0
    %726 = vmatprep.subr.mxu0 0.0
    %727 = vmatpush1.msra.mxu0 0.0
    %728 = vmatprep.subr.mxu0 0.0
    %729 = vmatpush1.msra.mxu0 0.0
    %730 = vmatprep.subr.mxu0 0.0
    %731 = vmatpush1.msra.mxu0 0.0
    %732 = vmatprep.subr.mxu0 0.0
    %733 = vmatpush1.msra.mxu0 0.0
    %734 = vmatprep.subr.mxu0 0.0
    %735 = vmatpush1.msra.mxu0 0.0
    %736 = vmatprep.subr.mxu0 0.0
    %737 = vmatpush1.msra.mxu0 0.0
    %738 = vmatprep.subr.mxu0 0.0
    %739 = vmatpush1.msra.mxu0 0.0
    %740 = vmatprep.subr.mxu0 0.0
    %741 = vmatpush1.msra.mxu0 0.0
    %742 = vmatprep.subr.mxu0 0.0
    %743 = vmatpush1.msra.mxu0 0.0
    %744 = vmatprep.subr.mxu0 0.0
    %745 = vmatpush1.msra.mxu0 0.0
    %746 = vmatprep.subr.mxu0 0.0
    %747 = vmatpush1.msra.mxu0 0.0
    %748 = vmatprep.subr.mxu0 0.0
    %749 = vmatpush1.msra.mxu0 0.0
    %750 = vmatprep.subr.mxu0 0.0
    %751 = vmatpush1.msra.mxu0 0.0
    %752 = vmatprep.subr.mxu0 0.0
    %753 = vmatpush1.msra.mxu0 0.0
    %754 = vmatprep.subr.mxu0 0.0
    %755 = vmatpush1.msra.mxu0 0.0
    %756 = vmatprep.subr.mxu0 0.0
    %757 = vmatpush1.msra.mxu0 0.0
    %758 = vmatprep.subr.mxu0 0.0
    %759 = vmatpush1.msra.mxu0 0.0
    %760 = vmatprep.mubr.f32.mxu0 0.0
    %761 = vmatmul.mubr.f32.gmra.mrb[0].mxu0 %v688
    %v762 = vpop.f32.mrb[0].mxu0
    %v763 = vadd.f32 0.0, %v762
    %v764 = vpop.f32.mrb[0].mxu0
    %765 = vmatprep.mubr.f32.mxu0 0.0
    %766 = vmatmul.mubr.f32.gmra.mrb[0].mxu0 %v691
    %v767 = vpop.f32.mrb[0].mxu0
    %v768 = vadd.f32 0.0, %v767
    %v769 = vpop.f32.mrb[0].mxu0
    %770 = vdwg.mxu0
    %773 = vrot.lane.b32.xlu0 %v763, 92
    %v774 = vpop.permute.xlu0 %773
    %775 = vrot.lane.b32.xlu0 %v768, 92
    %v776 = vpop.permute.xlu0 %775
    %779 = vxpose.xlu0.b32.start [1/16] %v774, 128
    %780 = vxpose.xlu0.b32.cont [2/16] %v776, 128
    %781 = vxpose.xlu0.b32.cont [3/16] 0.0, 128
    %782 = vxpose.xlu0.b32.cont [4/16] 0.0, 128
    %783 = vxpose.xlu0.b32.cont [5/16] 0.0, 128
    %784 = vxpose.xlu0.b32.cont [6/16] 0.0, 128
    %785 = vxpose.xlu0.b32.cont [7/16] 0.0, 128
    %786 = vxpose.xlu0.b32.cont [8/16] 0.0, 128
    %787 = vxpose.xlu0.b32.cont [9/16] 0.0, 128
    %788 = vxpose.xlu0.b32.cont [10/16] 0.0, 128
    %789 = vxpose.xlu0.b32.cont [11/16] 0.0, 128
    %790 = vxpose.xlu0.b32.cont [12/16] 0.0, 128
    %791 = vxpose.xlu0.b32.cont [13/16] 0.0, 128
    %792 = vxpose.xlu0.b32.cont [14/16] 0.0, 128
    %793 = vxpose.xlu0.b32.cont [15/16] 0.0, 128
    %794 = vxpose.xlu0.b32.end [16/16] 0.0, 128
    %v795 = vpop.trf.xlu0
    %v796 = vpop.trf.xlu0
    %v797 = vpop.trf.xlu0
    %v798 = vpop.trf.xlu0
    %v799 = vpop.trf.xlu0
    %v800 = vpop.trf.xlu0
    %v801 = vpop.trf.xlu0
    %v802 = vpop.trf.xlu0
    %v803 = vpop.trf.xlu0
    %v804 = vpop.trf.xlu0
    %v805 = vpop.trf.xlu0
    %v806 = vpop.trf.xlu0
    %v807 = vpop.trf.xlu0
    %v808 = vpop.trf.xlu0
    %v809 = vpop.trf.xlu0
    %v810 = vpop.trf.xlu0
    %811 = vset.pattern.permute.xlu0 37
    %812 = vperm.xlu0 %811, %v763
    %v813 = vpop.permute.xlu0 %812
    %815 = vset.pattern.permute.xlu0 37
    %816 = vperm.xlu0 %815, %v768
    %v817 = vpop.permute.xlu0 %816
    %v819 = vlaneseq
    %v820 = vshrl.u32 %v819, 7
    %v821 = vsub.s32 0, %v820
    %v822 = vrot.slane %v795, %v821
    %v823 = vadd.f32 %v813, %v822
    %v824 = vadd.f32 %v817, %v822
    %v825 = vstv %s681
    %v826 = vmul.f32 %v54, %v825
    %v827 = vmul.f32 %v55, %v825
    %v828 = vadd.f32 %v823, %v826
    %v829 = vadd.f32 %v824, %v827
    %v830 = vmul.f32 %v828, 0.2
    %v831 = vmul.f32 %v829, 0.2
    %v832 = vmax.f32 %v828, %v830
    %v833 = vmax.f32 %v829, %v831
    %v834 = vadd.f32 %v832, %v59
    %v835 = vadd.f32 %v833, %v60
    %v836 = vsel %vm214, %v834, -inf
    %837 = vmax.xlane.f32.xlu0 %v836
    %v838 = vpop.xlane.xlu0 %837
    %v839 = vsel %vm218, %v835, -inf
    %840 = vmax.xlane.f32.xlu0 %v839
    %v841 = vpop.xlane.xlu0 %840
    %v842 = vsub.f32 %v834, %v838
    %v843 = vsub.f32 %v835, %v841
    %v844 = vmul.f32 %v842, 1.442695
    %v845 = vpow.pop %v844
    %v846 = vmul.f32 %v843, 1.442695
    %v847 = vpow.pop %v846
    %v848 = vsel %vm214, %v845, 0.0
    %849 = vadd.xlane.f32.xlu0 %v848
    %v850 = vpop.xlane.xlu0 %849
    %v851 = vsel %vm218, %v847, 0.0
    %852 = vadd.xlane.f32.xlu0 %v851
    %v853 = vpop.xlane.xlu0 %852
    %v854 = vrcp.pop %v850
    %v855 = vrcp.pop %v853
    %v856 = vmul.f32 %v845, %v854
    %v857 = vmul.f32 %v847, %v855
    %v859 = vsel %vm214, %v856, 0
    %v862 = vsel %vm214, %v857, 0
    %v864 = vsel %vm70, %v768, 0
    %866 = vmatprep.subr.mxu0 0.0
    %867 = vmatpush1.msra.mxu0 %v763
    %868 = vmatprep.subr.mxu0 0.0
    %869 = vmatpush1.msra.mxu0 %v864
    %870 = vmatprep.subr.mxu0 0.0
    %871 = vmatpush1.msra.mxu0 0.0
    %872 = vmatprep.subr.mxu0 0.0
    %873 = vmatpush1.msra.mxu0 0.0
    %874 = vmatprep.subr.mxu0 0.0
    %875 = vmatpush1.msra.mxu0 0.0
    %876 = vmatprep.subr.mxu0 0.0
    %877 = vmatpush1.msra.mxu0 0.0
    %878 = vmatprep.subr.mxu0 0.0
    %879 = vmatpush1.msra.mxu0 0.0
    %880 = vmatprep.subr.mxu0 0.0
    %881 = vmatpush1.msra.mxu0 0.0
    %882 = vmatprep.subr.mxu0 0.0
    %883 = vmatpush1.msra.mxu0 0.0
    %884 = vmatprep.subr.mxu0 0.0
    %885 = vmatpush1.msra.mxu0 0.0
    %886 = vmatprep.subr.mxu0 0.0
    %887 = vmatpush1.msra.mxu0 0.0
    %888 = vmatprep.subr.mxu0 0.0
    %889 = vmatpush1.msra.mxu0 0.0
    %890 = vmatprep.subr.mxu0 0.0
    %891 = vmatpush1.msra.mxu0 0.0
    %892 = vmatprep.subr.mxu0 0.0
    %893 = vmatpush1.msra.mxu0 0.0
    %894 = vmatprep.subr.mxu0 0.0
    %895 = vmatpush1.msra.mxu0 0.0
    %896 = vmatprep.subr.mxu0 0.0
    %897 = vmatpush1.msra.mxu0 0.0
    %898 = vmatprep.subr.mxu0 0.0
    %899 = vmatpush1.msra.mxu0 0.0
    %900 = vmatprep.subr.mxu0 0.0
    %901 = vmatpush1.msra.mxu0 0.0
    %902 = vmatprep.subr.mxu0 0.0
    %903 = vmatpush1.msra.mxu0 0.0
    %904 = vmatprep.subr.mxu0 0.0
    %905 = vmatpush1.msra.mxu0 0.0
    %906 = vmatprep.subr.mxu0 0.0
    %907 = vmatpush1.msra.mxu0 0.0
    %908 = vmatprep.subr.mxu0 0.0
    %909 = vmatpush1.msra.mxu0 0.0
    %910 = vmatprep.subr.mxu0 0.0
    %911 = vmatpush1.msra.mxu0 0.0
    %912 = vmatprep.subr.mxu0 0.0
    %913 = vmatpush1.msra.mxu0 0.0
    %914 = vmatprep.subr.mxu0 0.0
    %915 = vmatpush1.msra.mxu0 0.0
    %916 = vmatprep.subr.mxu0 0.0
    %917 = vmatpush1.msra.mxu0 0.0
    %918 = vmatprep.subr.mxu0 0.0
    %919 = vmatpush1.msra.mxu0 0.0
    %920 = vmatprep.subr.mxu0 0.0
    %921 = vmatpush1.msra.mxu0 0.0
    %922 = vmatprep.subr.mxu0 0.0
    %923 = vmatpush1.msra.mxu0 0.0
    %924 = vmatprep.subr.mxu0 0.0
    %925 = vmatpush1.msra.mxu0 0.0
    %926 = vmatprep.subr.mxu0 0.0
    %927 = vmatpush1.msra.mxu0 0.0
    %928 = vmatprep.subr.mxu0 0.0
    %929 = vmatpush1.msra.mxu0 0.0
    %930 = vmatprep.mubr.f32.mxu0 0.0
    %931 = vmatmul.mubr.f32.gmra.mrb[0].mxu0 %v859
    %v932 = vpop.f32.mrb[0].mxu0
    %v933 = vadd.f32 0.0, %v932
    %v934 = vpop.f32.mrb[0].mxu0
    %935 = vmatprep.mubr.f32.mxu0 0.0
    %936 = vmatmul.mubr.f32.gmra.mrb[0].mxu0 %v862
    %v937 = vpop.f32.mrb[0].mxu0
    %v938 = vadd.f32 0.0, %v937
    %v939 = vpop.f32.mrb[0].mxu0
    %940 = vdwg.mxu0
    %v941 = vsel %vm380, %v933, 0.0
    %v942 = vsel %vm636, %v938, 0.0
    %v943 = vadd.f32 %v941, %v942
    %v944 = vrot.slane %v943, 4
    %v945 = vadd.f32 %v943, %v944
    %v946 = vrot.slane %v945, 2
    %v947 = vadd.f32 %v945, %v946
    %v948 = vrot.slane %v947, 1
    %v949 = vadd.f32 %v947, %v948
    %v950 = vmul.f32 %v933, %v933
    %v951 = vmul.f32 %v938, %v938
    %v952 = vsel %vm380, %v950, 0.0
    %v953 = vsel %vm636, %v951, 0.0
    %v954 = vadd.f32 %v952, %v953
    %v955 = vrot.slane %v954, 4
    %v956 = vadd.f32 %v954, %v955
    %v957 = vrot.slane %v956, 2
    %v958 = vadd.f32 %v956, %v957
    %v959 = vrot.slane %v958, 1
    %v960 = vadd.f32 %v958, %v959
    %v961 = vmul.f32 %v949, 0.083333336
    %v962 = vmul.f32 %v960, 0.083333336
    %v963 = vmul.f32 %v961, %v961
    %v964 = vsub.f32 %v962, %v963
    %v965 = vmax.f32 %v964, 0.0
    %v966 = vsub.f32 %v933, %v961
    %v967 = vsub.f32 %v938, %v961
    %v968 = vadd.f32 %v965, 1e-05
    %v969 = vrsqrt.pop %v968
    %v970 = vmul.f32 %v966, %v969
    %v971 = vmul.f32 %v967, %v969
    %v972 = vlaneseq
    %v973 = vshrl.u32 %v972, 7
    %v974 = vsub.s32 4, %v973
    %v975 = vrot.slane %v56, %v974
    %v976 = vmul.f32 %v975, %v970
    %v977 = vmul.f32 %v975, %v971
    %v978 = vlaneseq
    %v979 = vshrl.u32 %v978, 7
    %v980 = vsub.s32 5, %v979
    %v981 = vrot.slane %v56, %v980
    %v982 = vadd.f32 %v976, %v981
    %v983 = vadd.f32 %v977, %v981
    %v984 = vadd.f32 %v982, %v679
    %v985 = vadd.f32 %v983, %v680
    %v986 = vld [vmem:[%s3] sm:$0x3]
    %v988 = vsel %vm214, %v986, 0
    %v991 = vsel %vm70, %v985, 0
    %993 = vmatprep.subr.mxu0 0.0
    %994 = vmatpush1.msra.mxu0 %v984
    %995 = vmatprep.subr.mxu0 0.0
    %996 = vmatpush1.msra.mxu0 %v991
    %997 = vmatprep.subr.mxu0 0.0
    %998 = vmatpush1.msra.mxu0 0.0
    %999 = vmatprep.subr.mxu0 0.0
    %1000 = vmatpush1.msra.mxu0 0.0
    %1001 = vmatprep.subr.mxu0 0.0
    %1002 = vmatpush1.msra.mxu0 0.0
    %1003 = vmatprep.subr.mxu0 0.0
    %1004 = vmatpush1.msra.mxu0 0.0
    %1005 = vmatprep.subr.mxu0 0.0
    %1006 = vmatpush1.msra.mxu0 0.0
    %1007 = vmatprep.subr.mxu0 0.0
    %1008 = vmatpush1.msra.mxu0 0.0
    %1009 = vmatprep.subr.mxu0 0.0
    %1010 = vmatpush1.msra.mxu0 0.0
    %1011 = vmatprep.subr.mxu0 0.0
    %1012 = vmatpush1.msra.mxu0 0.0
    %1013 = vmatprep.subr.mxu0 0.0
    %1014 = vmatpush1.msra.mxu0 0.0
    %1015 = vmatprep.subr.mxu0 0.0
    %1016 = vmatpush1.msra.mxu0 0.0
    %1017 = vmatprep.subr.mxu0 0.0
    %1018 = vmatpush1.msra.mxu0 0.0
    %1019 = vmatprep.subr.mxu0 0.0
    %1020 = vmatpush1.msra.mxu0 0.0
    %1021 = vmatprep.subr.mxu0 0.0
    %1022 = vmatpush1.msra.mxu0 0.0
    %1023 = vmatprep.subr.mxu0 0.0
    %1024 = vmatpush1.msra.mxu0 0.0
    %1025 = vmatprep.subr.mxu0 0.0
    %1026 = vmatpush1.msra.mxu0 0.0
    %1027 = vmatprep.subr.mxu0 0.0
    %1028 = vmatpush1.msra.mxu0 0.0
    %1029 = vmatprep.subr.mxu0 0.0
    %1030 = vmatpush1.msra.mxu0 0.0
    %1031 = vmatprep.subr.mxu0 0.0
    %1032 = vmatpush1.msra.mxu0 0.0
    %1033 = vmatprep.subr.mxu0 0.0
    %1034 = vmatpush1.msra.mxu0 0.0
    %1035 = vmatprep.subr.mxu0 0.0
    %1036 = vmatpush1.msra.mxu0 0.0
    %1037 = vmatprep.subr.mxu0 0.0
    %1038 = vmatpush1.msra.mxu0 0.0
    %1039 = vmatprep.subr.mxu0 0.0
    %1040 = vmatpush1.msra.mxu0 0.0
    %1041 = vmatprep.subr.mxu0 0.0
    %1042 = vmatpush1.msra.mxu0 0.0
    %1043 = vmatprep.subr.mxu0 0.0
    %1044 = vmatpush1.msra.mxu0 0.0
    %1045 = vmatprep.subr.mxu0 0.0
    %1046 = vmatpush1.msra.mxu0 0.0
    %1047 = vmatprep.subr.mxu0 0.0
    %1048 = vmatpush1.msra.mxu0 0.0
    %1049 = vmatprep.subr.mxu0 0.0
    %1050 = vmatpush1.msra.mxu0 0.0
    %1051 = vmatprep.subr.mxu0 0.0
    %1052 = vmatpush1.msra.mxu0 0.0
    %1053 = vmatprep.subr.mxu0 0.0
    %1054 = vmatpush1.msra.mxu0 0.0
    %1055 = vmatprep.subr.mxu0 0.0
    %1056 = vmatpush1.msra.mxu0 0.0
    %1057 = vmatprep.mubr.f32.mxu0 0.0
    %1058 = vmatmul.mubr.f32.gmra.mrb[0].mxu0 %v988
    %v1059 = vpop.f32.mrb[0].mxu0
    %v1060 = vadd.f32 0.0, %v1059
    %v1061 = vpop.f32.mrb[0].mxu0
    %1062 = vdwg.mxu0
    %vm1063 = vcmask 91136
    %v1064 = vsel %vm1063, %v986, 0.0
    %1065 = vadd.xlane.f32.xlu0 %v1064
    %v1066 = vpop.xlane.xlu0 %1065
    %v1067 = vmax.f32 %v1066, 1.0
    %v1068 = vrcp.pop %v1067
    %v1069 = vmul.f32 %v1060, %v1068
    %v1070 = vlaneseq
    %v1071 = vshrl.u32 %v1070, 7
    %v1072 = vsub.s32 0, %v1071
    %v1073 = vrot.slane %v986, %v1072
    %1075 = vbcast.lane.b32.xlu0 %v1073, 256
    %v1076 = vpop.permute.xlu0 %1075
    %s1078 = sor.u32 256, 8
    %1079 = vbcast.lane.b32.xlu0 %v1073, %s1078
    %v1080 = vpop.permute.xlu0 %1079
    %vm1081 = vcmp.gt.f32.partialorder %v1076, 0.0
    %vm1082 = vcmp.gt.f32.partialorder %v1080, 0.0
    %v1083 = vsel %vm1081, 1, 0
    %v1084 = vsel %vm1082, 1, 0
    %vm1085 = vcmp.eq.s32.totalorder %v1083, 1
    %vm1086 = vcmp.eq.s32.totalorder %v1084, 1
    %v1087 = vsel %vm1085, %v984, -1e+30
    %v1088 = vsel %vm1086, %v985, -1e+30
    %v1089 = vsel %vm380, %v1087, -inf
    %v1090 = vsel %vm636, %v1088, -inf
    %v1091 = vmax.f32 %v1089, %v1090
    %v1092 = vrot.slane %v1091, 4
    %v1093 = vmax.f32 %v1091, %v1092
    %v1094 = vrot.slane %v1093, 2
    %v1095 = vmax.f32 %v1093, %v1094
    %v1096 = vrot.slane %v1095, 1
    %v1097 = vmax.f32 %v1095, %v1096
    %v1098 = vlaneseq
    %v1099 = vshrl.u32 %v1098, 7
    %v1100 = vsub.s32 1, %v1099
    %v1101 = vrot.slane %v986, %v1100
    %1103 = vbcast.lane.b32.xlu0 %v1101, 256
    %v1104 = vpop.permute.xlu0 %1103
    %s1106 = sor.u32 256, 8
    %1107 = vbcast.lane.b32.xlu0 %v1101, %s1106
    %v1108 = vpop.permute.xlu0 %1107
    %vm1109 = vcmp.gt.f32.partialorder %v1104, 0.0
    %vm1110 = vcmp.gt.f32.partialorder %v1108, 0.0
    %v1111 = vsel %vm1109, 1, 0
    %v1112 = vsel %vm1110, 1, 0
    %vm1113 = vcmp.eq.s32.totalorder %v1111, 1
    %vm1114 = vcmp.eq.s32.totalorder %v1112, 1
    %v1115 = vsel %vm1113, %v984, -1e+30
    %v1116 = vsel %vm1114, %v985, -1e+30
    %v1117 = vsel %vm380, %v1115, -inf
    %v1118 = vsel %vm636, %v1116, -inf
    %v1119 = vmax.f32 %v1117, %v1118
    %v1120 = vrot.slane %v1119, 4
    %v1121 = vmax.f32 %v1119, %v1120
    %v1122 = vrot.slane %v1121, 2
    %v1123 = vmax.f32 %v1121, %v1122
    %v1124 = vrot.slane %v1123, 1
    %v1125 = vmax.f32 %v1123, %v1124
    %vm1126 = vcmask 1040384
    %v1127 = vsel %vm1126, %v1097, %v1125
    %1129 = vrot.lane.b32.xlu0 %v1127, 36
    %v1130 = vpop.permute.xlu0 %1129
    %1133 = vrot.lane.b32.xlu0 %v1069, 72
    %v1134 = vpop.permute.xlu0 %1133
    %v1136 = vsel %vm380, %v1060, %v1130
    %vm1137 = vcmask 588800
    %v1138 = vsel %vm1137, %v1136, %v1134
    %v1139 = vld [vmem:[%s8] sm:$0xff]
    %v1140 = vld [vmem:[%s8 + $0x8] sm:$0xff]
    %v1141 = vld [vmem:[%s8 + $0x10] sm:$0xff]
    %v1142 = vld [vmem:[%s8 + $0x18] sm:$0xff]
    %v1143 = vld [vmem:[%s8 + $0x20] sm:$0xff]
    %v1144 = vld [vmem:[%s8 + $0x28] sm:$0xff]
    %v1145 = vld [vmem:[%s8 + $0x30] sm:$0xff]
    %v1146 = vld [vmem:[%s8 + $0x38] sm:$0xff]
    %v1147 = vld [vmem:[%s8 + $0x40] sm:$0xff]
    %v1148 = vld [vmem:[%s8 + $0x48] sm:$0xff]
    %v1149 = vld [vmem:[%s8 + $0x50] sm:$0xff]
    %v1150 = vld [vmem:[%s8 + $0x58] sm:$0xff]
    %v1151 = vld [vmem:[%s8 + $0x60] sm:$0xff]
    %v1152 = vld [vmem:[%s8 + $0x68] sm:$0xf]
    %v1153 = vlaneseq
    %v1154 = vshrl.u32 %v1153, 7
    %v1155 = vsub.s32 6, %v1154
    %v1156 = vrot.slane %v56, %v1155
    %vm1157 = vcmask 883712
    %v1159 = vsel %vm1157, %v1138, 0
    %v1162 = vsel %vm70, %v1152, 0
    %1164 = vmatprep.subr.mxu0 0.0
    %1165 = vmatpush1.msra.mxu0 %v1139
    %1166 = vmatprep.subr.mxu0 0.0
    %1167 = vmatpush1.msra.mxu0 %v1140
    %1168 = vmatprep.subr.mxu0 0.0
    %1169 = vmatpush1.msra.mxu0 %v1141
    %1170 = vmatprep.subr.mxu0 0.0
    %1171 = vmatpush1.msra.mxu0 %v1142
    %1172 = vmatprep.subr.mxu0 0.0
    %1173 = vmatpush1.msra.mxu0 %v1143
    %1174 = vmatprep.subr.mxu0 0.0
    %1175 = vmatpush1.msra.mxu0 %v1144
    %1176 = vmatprep.subr.mxu0 0.0
    %1177 = vmatpush1.msra.mxu0 %v1145
    %1178 = vmatprep.subr.mxu0 0.0
    %1179 = vmatpush1.msra.mxu0 %v1146
    %1180 = vmatprep.subr.mxu0 0.0
    %1181 = vmatpush1.msra.mxu0 %v1147
    %1182 = vmatprep.subr.mxu0 0.0
    %1183 = vmatpush1.msra.mxu0 %v1148
    %1184 = vmatprep.subr.mxu0 0.0
    %1185 = vmatpush1.msra.mxu0 %v1149
    %1186 = vmatprep.subr.mxu0 0.0
    %1187 = vmatpush1.msra.mxu0 %v1150
    %1188 = vmatprep.subr.mxu0 0.0
    %1189 = vmatpush1.msra.mxu0 %v1151
    %1190 = vmatprep.subr.mxu0 0.0
    %1191 = vmatpush1.msra.mxu0 %v1162
    %1192 = vmatprep.subr.mxu0 0.0
    %1193 = vmatpush1.msra.mxu0 0.0
    %1194 = vmatprep.subr.mxu0 0.0
    %1195 = vmatpush1.msra.mxu0 0.0
    %1196 = vmatprep.subr.mxu0 0.0
    %1197 = vmatpush1.msra.mxu0 0.0
    %1198 = vmatprep.subr.mxu0 0.0
    %1199 = vmatpush1.msra.mxu0 0.0
    %1200 = vmatprep.subr.mxu0 0.0
    %1201 = vmatpush1.msra.mxu0 0.0
    %1202 = vmatprep.subr.mxu0 0.0
    %1203 = vmatpush1.msra.mxu0 0.0
    %1204 = vmatprep.subr.mxu0 0.0
    %1205 = vmatpush1.msra.mxu0 0.0
    %1206 = vmatprep.subr.mxu0 0.0
    %1207 = vmatpush1.msra.mxu0 0.0
    %1208 = vmatprep.subr.mxu0 0.0
    %1209 = vmatpush1.msra.mxu0 0.0
    %1210 = vmatprep.subr.mxu0 0.0
    %1211 = vmatpush1.msra.mxu0 0.0
    %1212 = vmatprep.subr.mxu0 0.0
    %1213 = vmatpush1.msra.mxu0 0.0
    %1214 = vmatprep.subr.mxu0 0.0
    %1215 = vmatpush1.msra.mxu0 0.0
    %1216 = vmatprep.subr.mxu0 0.0
    %1217 = vmatpush1.msra.mxu0 0.0
    %1218 = vmatprep.subr.mxu0 0.0
    %1219 = vmatpush1.msra.mxu0 0.0
    %1220 = vmatprep.subr.mxu0 0.0
    %1221 = vmatpush1.msra.mxu0 0.0
    %1222 = vmatprep.subr.mxu0 0.0
    %1223 = vmatpush1.msra.mxu0 0.0
    %1224 = vmatprep.subr.mxu0 0.0
    %1225 = vmatpush1.msra.mxu0 0.0
    %1226 = vmatprep.subr.mxu0 0.0
    %1227 = vmatpush1.msra.mxu0 0.0
    %1228 = vmatprep.mubr.f32.mxu0 0.0
    %1229 = vmatmul.mubr.f32.gmra.mrb[0].mxu0 %v1159
    %v1230 = vpop.f32.mrb[0].mxu0
    %v1231 = vadd.f32 %v1156, %v1230
    %v1232 = vpop.f32.mrb[0].mxu0
    %1233 = vdwg.mxu0
    %s1234 = sld [smem:[#allocation2 + $0x3]]
    %vm1235 = vcmp.ge.f32.partialorder %v1231, 0.0
    %v1236 = vstv %s1234
    %v1237 = vmul.f32 %v1236, %v1231
    %v1238 = vsel %vm1235, %v1231, %v1237
    %v1239 = vld [vmem:[%s9] sm:$0xff]
    %v1240 = vld [vmem:[%s9 + $0x8] sm:$0xff]
    %v1241 = vld [vmem:[%s9 + $0x10] sm:$0xff]
    %v1242 = vld [vmem:[%s9 + $0x18] sm:$0xff]
    %v1243 = vld [vmem:[%s9 + $0x20] sm:$0xff]
    %v1244 = vld [vmem:[%s9 + $0x28] sm:$0xff]
    %v1245 = vld [vmem:[%s9 + $0x30] sm:$0xff]
    %v1246 = vld [vmem:[%s9 + $0x38] sm:$0xff]
    %v1247 = vld [vmem:[%s9 + $0x40] sm:$0xff]
    %v1248 = vld [vmem:[%s9 + $0x48] sm:$0xff]
    %v1249 = vld [vmem:[%s9 + $0x50] sm:$0xff]
    %v1250 = vld [vmem:[%s9 + $0x58] sm:$0xff]
    %v1251 = vld [vmem:[%s9 + $0x60] sm:$0xff]
    %v1252 = vld [vmem:[%s9 + $0x68] sm:$0xf]
    %v1253 = vlaneseq
    %v1254 = vshrl.u32 %v1253, 7
    %v1255 = vsub.s32 7, %v1254
    %v1256 = vrot.slane %v56, %v1255
    %v1258 = vsel %vm1157, %v1238, 0
    %v1261 = vsel %vm70, %v1252, 0
    %1263 = vmatprep.subr.mxu0 0.0
    %1264 = vmatpush1.msra.mxu0 %v1239
    %1265 = vmatprep.subr.mxu0 0.0
    %1266 = vmatpush1.msra.mxu0 %v1240
    %1267 = vmatprep.subr.mxu0 0.0
    %1268 = vmatpush1.msra.mxu0 %v1241
    %1269 = vmatprep.subr.mxu0 0.0
    %1270 = vmatpush1.msra.mxu0 %v1242
    %1271 = vmatprep.subr.mxu0 0.0
    %1272 = vmatpush1.msra.mxu0 %v1243
    %1273 = vmatprep.subr.mxu0 0.0
    %1274 = vmatpush1.msra.mxu0 %v1244
    %1275 = vmatprep.subr.mxu0 0.0
    %1276 = vmatpush1.msra.mxu0 %v1245
    %1277 = vmatprep.subr.mxu0 0.0
    %1278 = vmatpush1.msra.mxu0 %v1246
    %1279 = vmatprep.subr.mxu0 0.0
    %1280 = vmatpush1.msra.mxu0 %v1247
    %1281 = vmatprep.subr.mxu0 0.0
    %1282 = vmatpush1.msra.mxu0 %v1248
    %1283 = vmatprep.subr.mxu0 0.0
    %1284 = vmatpush1.msra.mxu0 %v1249
    %1285 = vmatprep.subr.mxu0 0.0
    %1286 = vmatpush1.msra.mxu0 %v1250
    %1287 = vmatprep.subr.mxu0 0.0
    %1288 = vmatpush1.msra.mxu0 %v1251
    %1289 = vmatprep.subr.mxu0 0.0
    %1290 = vmatpush1.msra.mxu0 %v1261
    %1291 = vmatprep.subr.mxu0 0.0
    %1292 = vmatpush1.msra.mxu0 0.0
    %1293 = vmatprep.subr.mxu0 0.0
    %1294 = vmatpush1.msra.mxu0 0.0
    %1295 = vmatprep.subr.mxu0 0.0
    %1296 = vmatpush1.msra.mxu0 0.0
    %1297 = vmatprep.subr.mxu0 0.0
    %1298 = vmatpush1.msra.mxu0 0.0
    %1299 = vmatprep.subr.mxu0 0.0
    %1300 = vmatpush1.msra.mxu0 0.0
    %1301 = vmatprep.subr.mxu0 0.0
    %1302 = vmatpush1.msra.mxu0 0.0
    %1303 = vmatprep.subr.mxu0 0.0
    %1304 = vmatpush1.msra.mxu0 0.0
    %1305 = vmatprep.subr.mxu0 0.0
    %1306 = vmatpush1.msra.mxu0 0.0
    %1307 = vmatprep.subr.mxu0 0.0
    %1308 = vmatpush1.msra.mxu0 0.0
    %1309 = vmatprep.subr.mxu0 0.0
    %1310 = vmatpush1.msra.mxu0 0.0
    %1311 = vmatprep.subr.mxu0 0.0
    %1312 = vmatpush1.msra.mxu0 0.0
    %1313 = vmatprep.subr.mxu0 0.0
    %1314 = vmatpush1.msra.mxu0 0.0
    %1315 = vmatprep.subr.mxu0 0.0
    %1316 = vmatpush1.msra.mxu0 0.0
    %1317 = vmatprep.subr.mxu0 0.0
    %1318 = vmatpush1.msra.mxu0 0.0
    %1319 = vmatprep.subr.mxu0 0.0
    %1320 = vmatpush1.msra.mxu0 0.0
    %1321 = vmatprep.subr.mxu0 0.0
    %1322 = vmatpush1.msra.mxu0 0.0
    %1323 = vmatprep.subr.mxu0 0.0
    %1324 = vmatpush1.msra.mxu0 0.0
    %1325 = vmatprep.subr.mxu0 0.0
    %1326 = vmatpush1.msra.mxu0 0.0
    %1327 = vmatprep.mubr.f32.mxu0 0.0
    %1328 = vmatmul.mubr.f32.gmra.mrb[0].mxu0 %v1258
    %v1329 = vpop.f32.mrb[0].mxu0
    %v1330 = vadd.f32 %v1256, %v1329
    %v1331 = vpop.f32.mrb[0].mxu0
    %1332 = vdwg.mxu0
    %vm1333 = vcmask 9216
    %v1334 = vsel %vm1333, %v1330, -inf
    %1335 = vmax.xlane.f32.xlu0 %v1334
    %v1336 = vpop.xlane.xlu0 %1335
    %v1337 = vsub.f32 %v1330, %v1336
    %v1338 = vmul.f32 %v1337, 1.442695
    %v1339 = vpow.pop %v1338
    %v1340 = vsel %vm1333, %v1339, 0.0
    %1341 = vadd.xlane.f32.xlu0 %v1340
    %v1342 = vpop.xlane.xlu0 %1341
    %v1343 = vlog2.pop %v1342
    %v1344 = vmul.f32 %v1343, 0.6931472
    %v1345 = vadd.f32 %v1336, %v1344
    %v1346 = vsub.f32 %v1330, %v1345
    %1347 = vst.msk [vmem:[#allocation5] sm:$0x3] %vm1333, %v1346
    // Predicated region
    $region46: #{net_forward.1} parent=1 // pred_check
      _
    $region47: #{net_forward.1} parent=1 // pred_check_branch
      %1349 = sbr.rel (0) target = $region49
    $region48: #{net_forward.1} parent=1 // pred_region
      %s1351 = ssub.s32 32, 32
      %1352 = vsyncadd [#allocation3], %s1351
      %s1354 = sshll.u32 [#allocation5], 4
      %s1355 = int_to_ptr.vmem [resolvable:$true] %s1354
      %1357 = dma.vmem_to_hbm [thread:$0]  %s1355, 32, %s10, [#allocation3]
    $region49: #{net_forward.1} parent=1 // pred_fallthru
      _
    // Predicated region
    $region50: #{net_forward.1} parent=1 // pred_check
      _
    $region51: #{net_forward.1} parent=1 // pred_check_branch
      %1359 = sbr.rel (0) target = $region53
    $region52: #{net_forward.1} parent=1 // pred_region
      %1360 = dma.done [#allocation3], 32
    $region53: #{net_forward.1} parent=1 // pred_fallthru
      _
    %1361 = vsyncpa [#allocation3], 1
    %1362 = vsyncpa [#allocation4], 1

</llo_original>
